<compile_context>
chip_gen: v6e
topology: v6e:2x2x1
jax: 0.10.0
libtpu: 0.0.40
codegen_flags: <defaults>
</compile_context>

<pallas_src>
import math

import jax
import jax.numpy as jnp
from jax.experimental import pallas as pl
from jax.experimental.pallas import tpu as pltpu

# ------------------------- static (small) model config -------------------------
VOCAB = 50
EMB_DIM = 32
HIDDEN = 64          # hidden_size
NUM_LAYERS = 2       # num_layers
NUM_HEAD = 4         # num_head
HEAD_DIM = 16        # head_dim
ND = NUM_HEAD * HEAD_DIM
MAX_LEN = 16
CLS_HIDDEN = 64      # cls_hidden_size
NUM_CLS = 5
NEG_SLOPE = 0.01     # LeakyReLU default
LN_EPS = 1e-6
RING_U = 5           # ring attention targets: prev, self, next, emb, relay
OUT_PAD = 128        # lane-dense padded output width (real columns: NUM_CLS)

B = 2
L = 8

# Packed per-layer slab column offsets (weight slab wl / vector slab vl).
assert ND == HIDDEN  # required by the shared [HIDDEN, *] weight slab layout
_RQKV = 0                       # ring [WK | WV | WQ]
_RO = _RQKV + 3 * ND            # ring WO
_SQKV = _RO + HIDDEN            # star [WK | WV | WQ]
_SO = _SQKV + 3 * ND            # star WO
W_COLS = _SO + HIDDEN           # 512
_GAMMA = W_COLS                 # LayerNorm gamma (vector slab only)
_BETA = _GAMMA + HIDDEN         # LayerNorm beta
V_COLS = _BETA + HIDDEN         # 640


def _make_kernel(C, Lseq):
    """Kernel processing C batch elements (rows stacked) per grid step."""
    CL = C * Lseq

    def kernel(sl_ref, x_ref, pos_ref, gind_ref, wl_ref, vl_ref, wm_ref, bm_ref,
               out_ref):
        f32 = jnp.float32
        b0 = pl.program_id(0)

        def mm(x, w):      # bf16 MXU operands, f32 accumulation (big matmuls)
            return jnp.dot(x.astype(jnp.bfloat16), w.astype(jnp.bfloat16),
                           preferred_element_type=f32)

        def mmf(x, w):     # tiny f32 head-indicator matmuls (exact head sums)
            return jnp.dot(x, w, preferred_element_type=f32)

        def leaky(x):
            return jnp.where(x > 0, x, NEG_SLOPE * x)

        # 0/1 head-grouping indicators (1/sqrt(head_dim) already folded into WQ).
        g_scale = gind_ref[:, 0:NUM_HEAD]                         # [ND, NH] f32
        g_expand = gind_ref[0:NUM_HEAD, NUM_HEAD:NUM_HEAD + ND]   # [NH, ND] f32

        # masks from seq_len (scalar prefetch in SMEM) -- no mask DMA needed
        pos_iota = jax.lax.broadcasted_iota(jnp.int32, (1, Lseq, 1), 1)
        mask_rows = [(pos_iota < sl_ref[b0 * C + c]).astype(f32) for c in range(C)]
        mask_valid3 = jnp.concatenate(mask_rows, axis=0)          # [C, L, 1]
        mask_pad3 = 1.0 - mask_valid3
        mask_valid = mask_valid3.reshape(CL, 1)                   # [CL, 1]

        pos_in_seq = jax.lax.broadcasted_iota(
            jnp.int32, (C, Lseq, 1), 1).reshape(CL, 1)
        prev_keep = (pos_in_seq > 0).astype(f32)                  # zero first row/seq
        next_keep = (pos_in_seq < Lseq - 1).astype(f32)           # zero last row/seq

        # ---- StarTransEnc: emb_fc (Linear emb_dim -> hidden) + positional emb ----
        h = mm(x_ref[...], wm_ref[0, 0:EMB_DIM, 0:HIDDEN]) + bm_ref[0:1, 0:HIDDEN]
        embs = h + pos_ref[...]                                   # [CL, H]

        nodes = embs
        relay = jnp.mean(embs.reshape(C, Lseq, HIDDEN), axis=1)   # [C, H]

        for i in range(NUM_LAYERS):
            # ---------- LayerNorm over hidden ----------
            gamma = vl_ref[i:i + 1, _GAMMA:_GAMMA + HIDDEN]
            beta = vl_ref[i:i + 1, _BETA:_BETA + HIDDEN]
            mu = jnp.mean(nodes, axis=-1, keepdims=True)
            var = jnp.mean(jnp.square(nodes - mu), axis=-1, keepdims=True)
            xn = (nodes - mu) * jax.lax.rsqrt(var + LN_EPS) * gamma + beta  # [CL, H]

            # ---------- ring attention (_MSA1): one fused K|V|Q matmul ----------
            rows = jnp.concatenate([xn, embs, relay], axis=0)     # [2CL+C, H]
            qkv = mm(rows, wl_ref[i, :, _RQKV:_RQKV + 3 * ND]) \
                + vl_ref[i:i + 1, _RQKV:_RQKV + 3 * ND]           # [2CL+C, 3ND]
            q = qkv[0:CL, 2 * ND:3 * ND]                          # [CL, ND] (scaled)
            kv = qkv[0:CL, 0:2 * ND]                              # [CL, 2ND] key|val
            akv0 = qkv[CL:2 * CL, 0:2 * ND]                       # key/val of embs
            akv1 = qkv[2 * CL:2 * CL + C, 0:2 * ND]               # key/val of relay

            # unfold(3,1) neighbours via roll + row mask (cross-chunk rows masked)
            kv_prev = pltpu.roll(kv, shift=1, axis=0) * prev_keep
            kv_next = pltpu.roll(kv, shift=CL - 1, axis=0) * next_keep
            akv1_rows = jnp.broadcast_to(
                akv1.reshape(C, 1, 2 * ND), (C, Lseq, 2 * ND)).reshape(CL, 2 * ND)
            kv_all = jnp.stack(
                [kv_prev, kv, kv_next, akv0, akv1_rows], axis=0)  # [U, CL, 2ND]

            # per-head scores for all heads at once (f32 indicator matmul)
            qk = kv_all[:, :, 0:ND] * q                           # [U, CL, ND]
            s = mmf(qk.reshape(RING_U * CL, ND),
                    g_scale).reshape(RING_U, CL, NUM_HEAD)        # [U, CL, NH]
            m = jnp.max(s, axis=0, keepdims=True)
            e = jnp.exp(s - m)                                    # single exp on stack
            inv_den = pl.reciprocal(jnp.sum(e, axis=0, keepdims=True), approx=True)
            a = e * inv_den                                       # [U, CL, NH]
            w_exp = mmf(a.reshape(RING_U * CL, NUM_HEAD),
                        g_expand).reshape(RING_U, CL, ND)
            att = jnp.sum(w_exp * kv_all[:, :, ND:2 * ND], axis=0)  # [CL, ND]
            ring = mm(att, wl_ref[i, :, _RO:_RO + HIDDEN]) \
                + vl_ref[i:i + 1, _RO:_RO + HIDDEN]
            nodes = leaky(ring)                                   # [CL, H]

            # ---------- star attention (_MSA2): fused K|V|Q over [relay; nodes] ----
            rows_s = jnp.concatenate([relay, nodes], axis=0)      # [C+CL, H]
            qkv_s = mm(rows_s, wl_ref[i, :, _SQKV:_SQKV + 3 * ND]) \
                + vl_ref[i:i + 1, _SQKV:_SQKV + 3 * ND]           # [C+CL, 3ND]
            qs = qkv_s[0:C, 2 * ND:3 * ND]                        # query = WQ(relay)
            ks_r = qkv_s[0:C, 0:ND]
            vs_r = qkv_s[0:C, ND:2 * ND]
            ks_n = qkv_s[C:C + CL, 0:ND]
            vs_n = qkv_s[C:C + CL, ND:2 * ND]
            q_rep = jnp.broadcast_to(
                qs.reshape(C, 1, ND), (C, Lseq, ND)).reshape(CL, ND)

            s_r = mmf(qs * ks_r, g_scale).reshape(C, 1, NUM_HEAD)
            s_n = mmf(q_rep * ks_n, g_scale).reshape(C, Lseq, NUM_HEAD)
            s_n = jnp.where(mask_pad3 > 0.5, -1e30, s_n)          # masked_fill(-inf)
            m_s = jnp.maximum(s_r, jnp.max(s_n, axis=1, keepdims=True))
            e_r = jnp.exp(s_r - m_s)
            e_n = jnp.exp(s_n - m_s)
            inv_s = pl.reciprocal(
                e_r + jnp.sum(e_n, axis=1, keepdims=True), approx=True)
            a_r = (e_r * inv_s).reshape(C, NUM_HEAD)
            a_n = (e_n * inv_s).reshape(CL, NUM_HEAD)
            att_s = mmf(a_r, g_expand) * vs_r + jnp.sum(
                (mmf(a_n, g_expand) * vs_n).reshape(C, Lseq, ND), axis=1)  # [C, ND]
            rel = mm(att_s, wl_ref[i, :, _SO:_SO + HIDDEN]) \
                + vl_ref[i:i + 1, _SO:_SO + HIDDEN]
            relay = leaky(rel)                                    # [C, H]

            # zero out padded positions (masked_fill_(ex_mask, 0))
            nodes = nodes * mask_valid

        # ---------- classifier (_Cls): Linear -> LeakyReLU -> Linear ----------
        h1 = leaky(mm(nodes, wm_ref[1, :, 0:CLS_HIDDEN]) + bm_ref[1:2, 0:CLS_HIDDEN])
        out_ref[...] = mm(h1, wm_ref[2, 0:CLS_HIDDEN, :]) + bm_ref[2:3, :]

    return kernel


def make_params(key):
    keys = iter(jax.random.split(key, 32))

    def nrm(shape, scale=0.1):
        return (scale * jax.random.normal(next(keys), shape)).astype(jnp.float32)

    p = {
        "emb_table": nrm((VOCAB, EMB_DIM)),
        "pos_table": nrm((MAX_LEN, HIDDEN)),
        "wemb": nrm((EMB_DIM, HIDDEN)), "bemb": nrm((1, HIDDEN)),
        "lng": jnp.ones((NUM_LAYERS, 1, HIDDEN), jnp.float32),
        "lnb": jnp.zeros((NUM_LAYERS, 1, HIDDEN), jnp.float32),
        "rwq": nrm((NUM_LAYERS, HIDDEN, ND)), "rbq": nrm((NUM_LAYERS, 1, ND)),
        "rwk": nrm((NUM_LAYERS, HIDDEN, ND)), "rbk": nrm((NUM_LAYERS, 1, ND)),
        "rwv": nrm((NUM_LAYERS, HIDDEN, ND)), "rbv": nrm((NUM_LAYERS, 1, ND)),
        "rwo": nrm((NUM_LAYERS, ND, HIDDEN)), "rbo": nrm((NUM_LAYERS, 1, HIDDEN)),
        "swq": nrm((NUM_LAYERS, HIDDEN, ND)), "sbq": nrm((NUM_LAYERS, 1, ND)),
        "swk": nrm((NUM_LAYERS, HIDDEN, ND)), "sbk": nrm((NUM_LAYERS, 1, ND)),
        "swv": nrm((NUM_LAYERS, HIDDEN, ND)), "sbv": nrm((NUM_LAYERS, 1, ND)),
        "swo": nrm((NUM_LAYERS, ND, HIDDEN)), "sbo": nrm((NUM_LAYERS, 1, HIDDEN)),
        "cw1": nrm((HIDDEN, CLS_HIDDEN)), "cb1": nrm((1, CLS_HIDDEN)),
        "cw2": nrm((CLS_HIDDEN, NUM_CLS)), "cb2": nrm((1, NUM_CLS)),
    }
    return p


def pack_params(p):
    """Pack the 27 small parameter tensors into 4 slabs; fold 1/sqrt(d) into WQ."""
    inv = 1.0 / math.sqrt(HEAD_DIM)
    # per-layer weight slab [NL, HIDDEN, 512]: [ring K|V|Q | ring O | star K|V|Q | star O]
    wl = jnp.concatenate(
        [p["rwk"], p["rwv"], p["rwq"] * inv, p["rwo"],
         p["swk"], p["swv"], p["swq"] * inv, p["swo"]], axis=2).astype(jnp.bfloat16)
    # per-layer vector slab [NL, 640]: matching biases + LN gamma/beta (f32)
    vl = jnp.concatenate(
        [p["rbk"], p["rbv"], p["rbq"] * inv, p["rbo"],
         p["sbk"], p["sbv"], p["sbq"] * inv, p["sbo"],
         p["lng"], p["lnb"]], axis=2)[:, 0, :].astype(jnp.float32)
    # misc weight slab [3, HIDDEN, OUT_PAD]: emb_fc / cls fc1 / cls fc2 (zero padded)
    wm = jnp.zeros((3, HIDDEN, OUT_PAD), jnp.float32)
    wm = wm.at[0, :EMB_DIM, :HIDDEN].set(p["wemb"])
    wm = wm.at[1, :HIDDEN, :CLS_HIDDEN].set(p["cw1"])
    wm = wm.at[2, :CLS_HIDDEN, :NUM_CLS].set(p["cw2"])
    wm = wm.astype(jnp.bfloat16)
    bm = jnp.zeros((3, OUT_PAD), jnp.float32)
    bm = bm.at[0, :HIDDEN].set(p["bemb"][0])
    bm = bm.at[1, :CLS_HIDDEN].set(p["cb1"][0])
    bm = bm.at[2, :NUM_CLS].set(p["cb2"][0])
    return wl, vl, wm, bm


def make_indicators():
    """0/1 head-grouping indicators: gind[:, :NH] = G, gind[:NH, NH:] = G.T."""
    d = jnp.arange(ND)
    G = (d[:, None] // HEAD_DIM == jnp.arange(NUM_HEAD)[None, :]).astype(jnp.float32)
    gind = jnp.zeros((ND, NUM_HEAD + ND), jnp.float32)
    gind = gind.at[:, :NUM_HEAD].set(G)
    gind = gind.at[:NUM_HEAD, NUM_HEAD:].set(G.T)
    return gind


def st_seq_label_forward(words, seq_len, params, *, chunk=None):
    Bv, Lv = words.shape
    if chunk is None:
        # Stack `chunk` batch elements per grid step (fills the MXU M dimension and
        # amortizes per-step overhead) while keeping >=2 grid steps so both v7x
        # TensorCores get work; the extra step is ~free on single-TC v5e/v6e.
        chunk = max(1, (Bv + 1) // 2)
    if (chunk * Lv) % 8 != 0 and chunk < Bv:
        chunk = Bv  # single step => block == full array, (8,128) constraint exempt
    steps = -(-Bv // chunk)
    B_pad = steps * chunk
    if B_pad > Bv:
        words = jnp.pad(words, ((0, B_pad - Bv), (0, 0)))
        seq_len = jnp.pad(seq_len, (0, B_pad - Bv))
    CL = chunk * Lv

    # glue done in XLA: embedding gather (bf16, consumed only by the MXU) + pos tile
    emb_x = params["emb_table"][words].astype(jnp.bfloat16).reshape(B_pad * Lv, EMB_DIM)
    pos = jnp.tile(params["pos_table"][:Lv].astype(jnp.float32), (chunk, 1))  # [CL, H]
    gind = make_indicators()
    wl, vl, wm, bm = pack_params(params)
    seq_len_i32 = seq_len.astype(jnp.int32)

    flops_per_elem = (
        2 * Lv * EMB_DIM * HIDDEN
        + NUM_LAYERS * (
            2 * (2 * Lv + 1) * HIDDEN * 3 * ND
            + 4 * RING_U * Lv * ND * NUM_HEAD
            + 2 * Lv * ND * HIDDEN
            + 2 * (Lv + 1) * HIDDEN * 3 * ND
            + 4 * (Lv + 1) * ND * NUM_HEAD
            + 2 * ND * HIDDEN)
        + 2 * Lv * HIDDEN * CLS_HIDDEN
        + 2 * Lv * CLS_HIDDEN * OUT_PAD)
    bytes_per_step = (wl.size * 2 + wm.size * 2 + vl.size * 4 + bm.size * 4
                      + gind.size * 4 + pos.size * 4
                      + CL * EMB_DIM * 2 + CL * OUT_PAD * 4)
    cost = pl.CostEstimate(
        flops=int(flops_per_elem) * B_pad,
        transcendentals=int(B_pad * NUM_LAYERS * (RING_U * Lv + Lv + 1) * NUM_HEAD),
        bytes_accessed=int(bytes_per_step) * steps)

    kernel = _make_kernel(chunk, Lv)
    out_flat = pl.pallas_call(
        kernel,
        out_shape=jax.ShapeDtypeStruct((B_pad * Lv, OUT_PAD), jnp.float32),
        grid_spec=pltpu.PrefetchScalarGridSpec(
            num_scalar_prefetch=1,                    # seq_len -> SMEM
            grid=(steps,),
            in_specs=[
                pl.BlockSpec((CL, EMB_DIM), lambda b, sl: (b, 0)),
                pl.BlockSpec((CL, HIDDEN), lambda b, sl: (0, 0)),
                pl.BlockSpec((ND, NUM_HEAD + ND), lambda b, sl: (0, 0)),
                pl.BlockSpec((NUM_LAYERS, HIDDEN, W_COLS), lambda b, sl: (0, 0, 0)),
                pl.BlockSpec((NUM_LAYERS, V_COLS), lambda b, sl: (0, 0)),
                pl.BlockSpec((3, HIDDEN, OUT_PAD), lambda b, sl: (0, 0, 0)),
                pl.BlockSpec((3, OUT_PAD), lambda b, sl: (0, 0)),
            ],
            out_specs=pl.BlockSpec((CL, OUT_PAD), lambda b, sl: (b, 0)),
        ),
        compiler_params=pltpu.CompilerParams(
            dimension_semantics=("parallel",)),        # v7x: chunks split across TCs
        cost_estimate=cost,
    )(seq_len_i32, emb_x, pos, gind, wl, vl, wm, bm)

    logits = out_flat.reshape(B_pad, Lv, OUT_PAD)[:Bv, :, :NUM_CLS]
    # PyTorch forward returns output.transpose(1, 2): [B, num_cls, L]
    return jnp.transpose(logits, (0, 2, 1))


def reference_forward(words, seq_len, p):
    """Pure-JAX (non-Pallas) forward with the same math, for validation."""
    f32 = jnp.float32
    Bv, Lv = words.shape
    inv = 1.0 / math.sqrt(HEAD_DIM)

    def lin(x, w, b):
        return jnp.dot(x.astype(jnp.bfloat16), w.astype(jnp.bfloat16),
                       preferred_element_type=f32) + b

    def leaky(x):
        return jnp.where(x > 0, x, NEG_SLOPE * x)

    emb_x = p["emb_table"][words].astype(f32)
    mask = (jnp.arange(Lv)[None, :] < seq_len[:, None]).astype(f32)
    pos = p["pos_table"][:Lv].astype(f32)

    h = lin(emb_x.reshape(Bv * Lv, EMB_DIM), p["wemb"], p["bemb"]).reshape(Bv, Lv, HIDDEN)
    embs = h + pos[None]
    nodes = embs
    relay = jnp.mean(embs, axis=1)                                     # [B, H]
    mask_pad = 1.0 - mask

    for i in range(NUM_LAYERS):
        mu = jnp.mean(nodes, -1, keepdims=True)
        var = jnp.mean(jnp.square(nodes - mu), -1, keepdims=True)
        xn = (nodes - mu) * jax.lax.rsqrt(var + LN_EPS) * p["lng"][i][None] + p["lnb"][i][None]
        xnf = xn.reshape(Bv * Lv, HIDDEN)
        ef = embs.reshape(Bv * Lv, HIDDEN)

        q = lin(xnf, p["rwq"][i], p["rbq"][i]).reshape(Bv, Lv, ND)
        k = lin(xnf, p["rwk"][i], p["rbk"][i]).reshape(Bv, Lv, ND)
        v = lin(xnf, p["rwv"][i], p["rbv"][i]).reshape(Bv, Lv, ND)
        ak0 = lin(ef, p["rwk"][i], p["rbk"][i]).reshape(Bv, Lv, ND)
        av0 = lin(ef, p["rwv"][i], p["rbv"][i]).reshape(Bv, Lv, ND)
        ak1 = lin(relay, p["rwk"][i], p["rbk"][i])
        av1 = lin(relay, p["rwv"][i], p["rbv"][i])

        z = jnp.zeros((Bv, 1, ND), f32)
        keys = jnp.stack([jnp.concatenate([z, k[:, :-1]], 1), k,
                          jnp.concatenate([k[:, 1:], z], 1), ak0,
                          jnp.broadcast_to(ak1[:, None], (Bv, Lv, ND))], axis=2)
        vals = jnp.stack([jnp.concatenate([z, v[:, :-1]], 1), v,
                          jnp.concatenate([v[:, 1:], z], 1), av0,
                          jnp.broadcast_to(av1[:, None], (Bv, Lv, ND))], axis=2)
        qh = q.reshape(Bv, Lv, 1, NUM_HEAD, HEAD_DIM)
        kh = keys.reshape(Bv, Lv, RING_U, NUM_HEAD, HEAD_DIM)
        vh = vals.reshape(Bv, Lv, RING_U, NUM_HEAD, HEAD_DIM)
        s = jnp.sum(qh * kh, axis=-1) * inv                            # [B, L, U, NH]
        a = jax.nn.softmax(s, axis=2)
        att = jnp.sum(a[..., None] * vh, axis=2).reshape(Bv * Lv, ND)
        ring = lin(att, p["rwo"][i], p["rbo"][i]).reshape(Bv, Lv, HIDDEN)
        nodes = leaky(ring)

        y = jnp.concatenate([relay[:, None], nodes], axis=1)           # [B, L+1, H]
        yf = y.reshape(Bv * (Lv + 1), HIDDEN)
        qs = lin(relay, p["swq"][i], p["sbq"][i])
        ks = lin(yf, p["swk"][i], p["sbk"][i]).reshape(Bv, Lv + 1, ND)
        vs = lin(yf, p["swv"][i], p["sbv"][i]).reshape(Bv, Lv + 1, ND)
        s2 = jnp.sum(qs.reshape(Bv, 1, NUM_HEAD, HEAD_DIM)
                     * ks.reshape(Bv, Lv + 1, NUM_HEAD, HEAD_DIM), axis=-1) * inv
        smask = jnp.concatenate([jnp.zeros((Bv, 1), f32), mask_pad], axis=1)
        s2 = jnp.where(smask[..., None] > 0.5, -1e30, s2)
        a2 = jax.nn.softmax(s2, axis=1)
        att_s = jnp.sum(a2[..., None] * vs.reshape(Bv, Lv + 1, NUM_HEAD, HEAD_DIM),
                        axis=1).reshape(Bv, ND)
        relay = leaky(lin(att_s, p["swo"][i], p["sbo"][i]))
        nodes = nodes * mask[..., None]

    nf = nodes.reshape(Bv * Lv, HIDDEN)
    h1 = leaky(lin(nf, p["cw1"], p["cb1"]))
    logits = lin(h1, p["cw2"], p["cb2"]).reshape(Bv, Lv, NUM_CLS)
    return jnp.transpose(logits, (0, 2, 1))


if __name__ == "__main__":
    key = jax.random.PRNGKey(0)
    pkey, wkey = jax.random.split(key)
    params = make_params(pkey)

    words = jax.random.randint(wkey, (B, L), minval=1, maxval=VOCAB, dtype=jnp.int32)
    seq_len = jnp.array([L, 5], dtype=jnp.int32)

    out = st_seq_label_forward(words, seq_len, params)      # [B, num_cls, L]
    out = jax.block_until_ready(out)

    assert out.shape == (B, NUM_CLS, L), out.shape
    assert bool(jnp.all(jnp.isfinite(out)))

    ref = reference_forward(words, seq_len, params)
    assert bool(jnp.allclose(out, ref, atol=3e-2, rtol=3e-2)), (
        "max abs err = %e" % float(jnp.max(jnp.abs(out - ref))))

    print("KERNEL_OK")
</pallas_src>

<mosaic_0001>
module attributes {stable_mosaic.version = 11 : i64} {
  func.func @kernel(%arg0: i32, %arg1: memref<2xi32, #tpu.memory_space<smem>>, %arg2: memref<8x32xbf16, #tpu.memory_space<vmem>>, %arg3: memref<8x64xf32, #tpu.memory_space<vmem>>, %arg4: memref<64x68xf32, #tpu.memory_space<vmem>>, %arg5: memref<2x64x512xbf16, #tpu.memory_space<vmem>>, %arg6: memref<2x640xf32, #tpu.memory_space<vmem>>, %arg7: memref<3x64x128xbf16, #tpu.memory_space<vmem>>, %arg8: memref<3x128xf32, #tpu.memory_space<vmem>>, %arg9: memref<8x128xf32, #tpu.memory_space<vmem>>) attributes {dimension_semantics = [#tpu.dimension_semantics<parallel>], iteration_bounds = array<i64: 2>, scalar_prefetch = 1 : i64, scratch_operands = 0 : i64, tpu.core_type = #tpu.core_type<tc>, window_params = [{transform_indices = @transform_0, window_bounds = array<i64: 8, 32>}, {pipeline_mode = #tpu.pipeline_mode<synchronous>, transform_indices = @transform_1, window_bounds = array<i64: 8, 64>}, {pipeline_mode = #tpu.pipeline_mode<synchronous>, transform_indices = @transform_2, window_bounds = array<i64: 64, 68>}, {pipeline_mode = #tpu.pipeline_mode<synchronous>, transform_indices = @transform_3, window_bounds = array<i64: 2, 64, 512>}, {pipeline_mode = #tpu.pipeline_mode<synchronous>, transform_indices = @transform_4, window_bounds = array<i64: 2, 640>}, {pipeline_mode = #tpu.pipeline_mode<synchronous>, transform_indices = @transform_5, window_bounds = array<i64: 3, 64, 128>}, {pipeline_mode = #tpu.pipeline_mode<synchronous>, transform_indices = @transform_6, window_bounds = array<i64: 3, 128>}, {transform_indices = @transform_7, window_bounds = array<i64: 8, 128>}]} {
    %c0 = arith.constant 0 : index
    %c0_0 = arith.constant 0 : index
    %0 = vector.load %arg4[%c0, %c0_0] : memref<64x68xf32, #tpu.memory_space<vmem>>, vector<64x4xf32>
    %c0_1 = arith.constant 0 : index
    %c4 = arith.constant 4 : index
    %1 = vector.load %arg4[%c0_1, %c4] : memref<64x68xf32, #tpu.memory_space<vmem>>, vector<4x64xf32>
    %2 = tpu.iota {dimensions = array<i32: 1>} : vector<1x8x1xi32>
    %c1_i32 = arith.constant 1 : i32
    %3 = arith.muli %arg0, %c1_i32 : i32
    %c0_i32 = arith.constant 0 : i32
    %4 = arith.addi %3, %c0_i32 : i32
    %5 = arith.index_cast %4 : i32 to index
    %6 = memref.load %arg1[%5] : memref<2xi32, #tpu.memory_space<smem>>
    %7 = vector.broadcast %6 : i32 to vector<1x8x1xi32>
    %8 = arith.cmpi slt, %2, %7 : vector<1x8x1xi32>
    %9 = arith.extui %8 : vector<1x8x1xi1> to vector<1x8x1xi32>
    %10 = arith.sitofp %9 : vector<1x8x1xi32> to vector<1x8x1xf32>
    %cst = arith.constant 1.000000e+00 : f32
    %11 = vector.broadcast %cst : f32 to vector<1x8x1xf32>
    %12 = arith.subf %11, %10 : vector<1x8x1xf32>
    %13 = vector.shape_cast %10 : vector<1x8x1xf32> to vector<8x1xf32>
    %14 = tpu.iota {dimensions = array<i32: 1>} : vector<1x8x1xi32>
    %15 = vector.shape_cast %14 : vector<1x8x1xi32> to vector<8x1xi32>
    %c0_i32_2 = arith.constant 0 : i32
    %16 = vector.broadcast %c0_i32_2 : i32 to vector<8x1xi32>
    %17 = arith.cmpi sgt, %15, %16 : vector<8x1xi32>
    %18 = arith.extui %17 : vector<8x1xi1> to vector<8x1xi32>
    %19 = arith.sitofp %18 : vector<8x1xi32> to vector<8x1xf32>
    %c7_i32 = arith.constant 7 : i32
    %20 = vector.broadcast %c7_i32 : i32 to vector<8x1xi32>
    %21 = arith.cmpi slt, %15, %20 : vector<8x1xi32>
    %22 = arith.extui %21 : vector<8x1xi1> to vector<8x1xi32>
    %23 = arith.sitofp %22 : vector<8x1xi32> to vector<8x1xf32>
    %c0_3 = arith.constant 0 : index
    %c0_4 = arith.constant 0 : index
    %24 = vector.load %arg2[%c0_3, %c0_4] : memref<8x32xbf16, #tpu.memory_space<vmem>>, vector<8x32xbf16>
    %c0_5 = arith.constant 0 : index
    %c0_6 = arith.constant 0 : index
    %c0_7 = arith.constant 0 : index
    %25 = vector.load %arg7[%c0_5, %c0_6, %c0_7] : memref<3x64x128xbf16, #tpu.memory_space<vmem>>, vector<1x32x64xbf16>
    %26 = vector.shape_cast %25 : vector<1x32x64xbf16> to vector<32x64xbf16>
    %cst_8 = arith.constant dense<0.000000e+00> : vector<8x64xf32>
    %27 = tpu.matmul %24, %26, %cst_8 {dimension_numbers = #tpu.dot_dimension_numbers<[1], [0], [0], [1], [0, 0, 1, 1], [], []>} : vector<8x32xbf16>, vector<32x64xbf16>, vector<8x64xf32> -> vector<8x64xf32>
    %c0_9 = arith.constant 0 : index
    %c0_10 = arith.constant 0 : index
    %28 = vector.load %arg8[%c0_9, %c0_10] : memref<3x128xf32, #tpu.memory_space<vmem>>, vector<1x64xf32>
    %29 = vector.broadcast %28 : vector<1x64xf32> to vector<8x64xf32>
    %30 = arith.addf %27, %29 : vector<8x64xf32>
    %c0_11 = arith.constant 0 : index
    %c0_12 = arith.constant 0 : index
    %31 = vector.load %arg3[%c0_11, %c0_12] : memref<8x64xf32, #tpu.memory_space<vmem>>, vector<8x64xf32>
    %32 = arith.addf %30, %31 : vector<8x64xf32>
    %33 = vector.shape_cast %32 : vector<8x64xf32> to vector<1x8x64xf32>
    %cst_13 = arith.constant dense<0.000000e+00> : vector<1x64xf32>
    %34 = vector.multi_reduction <add>, %33, %cst_13 [1] : vector<1x8x64xf32> to vector<1x64xf32>
    %cst_14 = arith.constant 8.000000e+00 : f32
    %35 = vector.broadcast %cst_14 : f32 to vector<1x64xf32>
    %36 = arith.divf %34, %35 : vector<1x64xf32>
    %c0_15 = arith.constant 0 : index
    %c512 = arith.constant 512 : index
    %37 = vector.load %arg6[%c0_15, %c512] : memref<2x640xf32, #tpu.memory_space<vmem>>, vector<1x64xf32>
    %c0_16 = arith.constant 0 : index
    %c576 = arith.constant 576 : index
    %38 = vector.load %arg6[%c0_16, %c576] : memref<2x640xf32, #tpu.memory_space<vmem>>, vector<1x64xf32>
    %cst_17 = arith.constant dense<0.000000e+00> : vector<8xf32>
    %39 = vector.multi_reduction <add>, %32, %cst_17 [1] : vector<8x64xf32> to vector<8xf32>
    %40 = vector.shape_cast %39 : vector<8xf32> to vector<8x1xf32>
    %cst_18 = arith.constant 6.400000e+01 : f32
    %41 = vector.broadcast %cst_18 : f32 to vector<8x1xf32>
    %42 = arith.divf %40, %41 : vector<8x1xf32>
    %43 = vector.broadcast %42 : vector<8x1xf32> to vector<8x64xf32>
    %44 = arith.subf %32, %43 : vector<8x64xf32>
    %45 = arith.mulf %44, %44 : vector<8x64xf32>
    %cst_19 = arith.constant dense<0.000000e+00> : vector<8xf32>
    %46 = vector.multi_reduction <add>, %45, %cst_19 [1] : vector<8x64xf32> to vector<8xf32>
    %47 = vector.shape_cast %46 : vector<8xf32> to vector<8x1xf32>
    %cst_20 = arith.constant 6.400000e+01 : f32
    %48 = vector.broadcast %cst_20 : f32 to vector<8x1xf32>
    %49 = arith.divf %47, %48 : vector<8x1xf32>
    %50 = vector.broadcast %42 : vector<8x1xf32> to vector<8x64xf32>
    %51 = arith.subf %32, %50 : vector<8x64xf32>
    %cst_21 = arith.constant 9.99999997E-7 : f32
    %52 = vector.broadcast %cst_21 : f32 to vector<8x1xf32>
    %53 = arith.addf %49, %52 : vector<8x1xf32>
    %54 = math.rsqrt %53 : vector<8x1xf32>
    %55 = vector.broadcast %54 : vector<8x1xf32> to vector<8x64xf32>
    %56 = arith.mulf %51, %55 : vector<8x64xf32>
    %57 = vector.broadcast %37 : vector<1x64xf32> to vector<8x64xf32>
    %58 = arith.mulf %56, %57 : vector<8x64xf32>
    %59 = vector.broadcast %38 : vector<1x64xf32> to vector<8x64xf32>
    %60 = arith.addf %58, %59 : vector<8x64xf32>
    %61 = tpu.concatenate %60, %32, %36 in 0 : vector<8x64xf32>, vector<8x64xf32>, vector<1x64xf32> -> vector<17x64xf32>
    %c0_22 = arith.constant 0 : index
    %c0_23 = arith.constant 0 : index
    %c0_24 = arith.constant 0 : index
    %62 = vector.load %arg5[%c0_22, %c0_23, %c0_24] : memref<2x64x512xbf16, #tpu.memory_space<vmem>>, vector<1x64x192xbf16>
    %63 = vector.shape_cast %62 : vector<1x64x192xbf16> to vector<64x192xbf16>
    %64 = arith.truncf %61 : vector<17x64xf32> to vector<17x64xbf16>
    %cst_25 = arith.constant dense<0.000000e+00> : vector<17x192xf32>
    %65 = tpu.matmul %64, %63, %cst_25 {dimension_numbers = #tpu.dot_dimension_numbers<[1], [0], [0], [1], [0, 0, 1, 1], [], []>} : vector<17x64xbf16>, vector<64x192xbf16>, vector<17x192xf32> -> vector<17x192xf32>
    %c0_26 = arith.constant 0 : index
    %c0_27 = arith.constant 0 : index
    %66 = vector.load %arg6[%c0_26, %c0_27] : memref<2x640xf32, #tpu.memory_space<vmem>>, vector<1x192xf32>
    %67 = vector.broadcast %66 : vector<1x192xf32> to vector<17x192xf32>
    %68 = arith.addf %65, %67 : vector<17x192xf32>
    %69 = vector.extract_strided_slice %68 {offsets = [0, 128], sizes = [8, 64], strides = [1, 1]} : vector<17x192xf32> to vector<8x64xf32>
    %70 = vector.extract_strided_slice %68 {offsets = [0, 0], sizes = [8, 128], strides = [1, 1]} : vector<17x192xf32> to vector<8x128xf32>
    %71 = vector.extract_strided_slice %68 {offsets = [8, 0], sizes = [8, 128], strides = [1, 1]} : vector<17x192xf32> to vector<8x128xf32>
    %72 = vector.extract_strided_slice %68 {offsets = [16, 0], sizes = [1, 128], strides = [1, 1]} : vector<17x192xf32> to vector<1x128xf32>
    %c1_i32_28 = arith.constant 1 : i32
    %73 = tpu.dynamic_rotate %70 by %c1_i32_28 dim 0 : vector<8x128xf32>, i32 -> vector<8x128xf32>
    %74 = vector.broadcast %19 : vector<8x1xf32> to vector<8x128xf32>
    %75 = arith.mulf %73, %74 : vector<8x128xf32>
    %c7_i32_29 = arith.constant 7 : i32
    %76 = tpu.dynamic_rotate %70 by %c7_i32_29 dim 0 : vector<8x128xf32>, i32 -> vector<8x128xf32>
    %77 = vector.broadcast %23 : vector<8x1xf32> to vector<8x128xf32>
    %78 = arith.mulf %76, %77 : vector<8x128xf32>
    %79 = vector.shape_cast %72 : vector<1x128xf32> to vector<1x1x128xf32>
    %80 = vector.shape_cast %79 : vector<1x1x128xf32> to vector<1x1x128xf32>
    %81 = vector.broadcast %80 : vector<1x1x128xf32> to vector<1x8x128xf32>
    %82 = vector.shape_cast %81 : vector<1x8x128xf32> to vector<8x128xf32>
    %83 = vector.shape_cast %75 : vector<8x128xf32> to vector<1x8x128xf32>
    %84 = vector.shape_cast %70 : vector<8x128xf32> to vector<1x8x128xf32>
    %85 = vector.shape_cast %78 : vector<8x128xf32> to vector<1x8x128xf32>
    %86 = vector.shape_cast %71 : vector<8x128xf32> to vector<1x8x128xf32>
    %87 = vector.shape_cast %82 : vector<8x128xf32> to vector<1x8x128xf32>
    %88 = tpu.concatenate %83, %84, %85, %86, %87 in 0 : vector<1x8x128xf32>, vector<1x8x128xf32>, vector<1x8x128xf32>, vector<1x8x128xf32>, vector<1x8x128xf32> -> vector<5x8x128xf32>
    %89 = vector.extract_strided_slice %88 {offsets = [0, 0, 0], sizes = [5, 8, 64], strides = [1, 1, 1]} : vector<5x8x128xf32> to vector<5x8x64xf32>
    %90 = vector.shape_cast %69 : vector<8x64xf32> to vector<1x8x64xf32>
    %91 = vector.broadcast %90 : vector<1x8x64xf32> to vector<5x8x64xf32>
    %92 = arith.mulf %89, %91 : vector<5x8x64xf32>
    %93 = vector.shape_cast %92 : vector<5x8x64xf32> to vector<40x64xf32>
    %cst_30 = arith.constant dense<0.000000e+00> : vector<40x4xf32>
    %94 = tpu.matmul %93, %0, %cst_30 {dimension_numbers = #tpu.dot_dimension_numbers<[1], [0], [0], [1], [0, 0, 1, 1], [], []>} : vector<40x64xf32>, vector<64x4xf32>, vector<40x4xf32> -> vector<40x4xf32>
    %95 = vector.shape_cast %94 : vector<40x4xf32> to vector<5x8x4xf32>
    %cst_31 = arith.constant dense<0xFF800000> : vector<8x4xf32>
    %96 = vector.multi_reduction <maximumf>, %95, %cst_31 [0] : vector<5x8x4xf32> to vector<8x4xf32>
    %97 = vector.shape_cast %96 : vector<8x4xf32> to vector<1x8x4xf32>
    %98 = vector.broadcast %97 : vector<1x8x4xf32> to vector<5x8x4xf32>
    %99 = arith.subf %95, %98 : vector<5x8x4xf32>
    %100 = math.exp %99 : vector<5x8x4xf32>
    %cst_32 = arith.constant dense<0.000000e+00> : vector<8x4xf32>
    %101 = vector.multi_reduction <add>, %100, %cst_32 [0] : vector<5x8x4xf32> to vector<8x4xf32>
    %102 = vector.shape_cast %101 : vector<8x4xf32> to vector<1x8x4xf32>
    %103 = tpu.reciprocal %102 {approx = true} : vector<1x8x4xf32> -> vector<1x8x4xf32>
    %104 = vector.broadcast %103 : vector<1x8x4xf32> to vector<5x8x4xf32>
    %105 = arith.mulf %100, %104 : vector<5x8x4xf32>
    %106 = vector.shape_cast %105 : vector<5x8x4xf32> to vector<40x4xf32>
    %cst_33 = arith.constant dense<0.000000e+00> : vector<40x64xf32>
    %107 = tpu.matmul %106, %1, %cst_33 {dimension_numbers = #tpu.dot_dimension_numbers<[1], [0], [0], [1], [0, 0, 1, 1], [], []>} : vector<40x4xf32>, vector<4x64xf32>, vector<40x64xf32> -> vector<40x64xf32>
    %108 = vector.shape_cast %107 : vector<40x64xf32> to vector<5x8x64xf32>
    %109 = vector.extract_strided_slice %88 {offsets = [0, 0, 64], sizes = [5, 8, 64], strides = [1, 1, 1]} : vector<5x8x128xf32> to vector<5x8x64xf32>
    %110 = arith.mulf %108, %109 : vector<5x8x64xf32>
    %cst_34 = arith.constant dense<0.000000e+00> : vector<8x64xf32>
    %111 = vector.multi_reduction <add>, %110, %cst_34 [0] : vector<5x8x64xf32> to vector<8x64xf32>
    %c0_35 = arith.constant 0 : index
    %c0_36 = arith.constant 0 : index
    %c192 = arith.constant 192 : index
    %112 = vector.load %arg5[%c0_35, %c0_36, %c192] : memref<2x64x512xbf16, #tpu.memory_space<vmem>>, vector<1x64x64xbf16>
    %113 = vector.shape_cast %112 : vector<1x64x64xbf16> to vector<64x64xbf16>
    %114 = arith.truncf %111 : vector<8x64xf32> to vector<8x64xbf16>
    %cst_37 = arith.constant dense<0.000000e+00> : vector<8x64xf32>
    %115 = tpu.matmul %114, %113, %cst_37 {dimension_numbers = #tpu.dot_dimension_numbers<[1], [0], [0], [1], [0, 0, 1, 1], [], []>} : vector<8x64xbf16>, vector<64x64xbf16>, vector<8x64xf32> -> vector<8x64xf32>
    %c0_38 = arith.constant 0 : index
    %c192_39 = arith.constant 192 : index
    %116 = vector.load %arg6[%c0_38, %c192_39] : memref<2x640xf32, #tpu.memory_space<vmem>>, vector<1x64xf32>
    %117 = vector.broadcast %116 : vector<1x64xf32> to vector<8x64xf32>
    %118 = arith.addf %115, %117 : vector<8x64xf32>
    %cst_40 = arith.constant 0.000000e+00 : f32
    %119 = vector.broadcast %cst_40 : f32 to vector<8x64xf32>
    %120 = arith.cmpf ogt, %118, %119 : vector<8x64xf32>
    %cst_41 = arith.constant 0.00999999977 : f32
    %121 = vector.broadcast %cst_41 : f32 to vector<8x64xf32>
    %122 = arith.mulf %121, %118 : vector<8x64xf32>
    %123 = arith.select %120, %118, %122 : vector<8x64xi1>, vector<8x64xf32>
    %124 = tpu.concatenate %36, %123 in 0 : vector<1x64xf32>, vector<8x64xf32> -> vector<9x64xf32>
    %c0_42 = arith.constant 0 : index
    %c0_43 = arith.constant 0 : index
    %c256 = arith.constant 256 : index
    %125 = vector.load %arg5[%c0_42, %c0_43, %c256] : memref<2x64x512xbf16, #tpu.memory_space<vmem>>, vector<1x64x192xbf16>
    %126 = vector.shape_cast %125 : vector<1x64x192xbf16> to vector<64x192xbf16>
    %127 = arith.truncf %124 : vector<9x64xf32> to vector<9x64xbf16>
    %cst_44 = arith.constant dense<0.000000e+00> : vector<9x192xf32>
    %128 = tpu.matmul %127, %126, %cst_44 {dimension_numbers = #tpu.dot_dimension_numbers<[1], [0], [0], [1], [0, 0, 1, 1], [], []>} : vector<9x64xbf16>, vector<64x192xbf16>, vector<9x192xf32> -> vector<9x192xf32>
    %c0_45 = arith.constant 0 : index
    %c256_46 = arith.constant 256 : index
    %129 = vector.load %arg6[%c0_45, %c256_46] : memref<2x640xf32, #tpu.memory_space<vmem>>, vector<1x192xf32>
    %130 = vector.broadcast %129 : vector<1x192xf32> to vector<9x192xf32>
    %131 = arith.addf %128, %130 : vector<9x192xf32>
    %132 = vector.extract_strided_slice %131 {offsets = [0, 128], sizes = [1, 64], strides = [1, 1]} : vector<9x192xf32> to vector<1x64xf32>
    %133 = vector.extract_strided_slice %131 {offsets = [0, 0], sizes = [1, 64], strides = [1, 1]} : vector<9x192xf32> to vector<1x64xf32>
    %134 = vector.extract_strided_slice %131 {offsets = [0, 64], sizes = [1, 64], strides = [1, 1]} : vector<9x192xf32> to vector<1x64xf32>
    %135 = vector.extract_strided_slice %131 {offsets = [1, 0], sizes = [8, 64], strides = [1, 1]} : vector<9x192xf32> to vector<8x64xf32>
    %136 = vector.extract_strided_slice %131 {offsets = [1, 64], sizes = [8, 64], strides = [1, 1]} : vector<9x192xf32> to vector<8x64xf32>
    %137 = vector.shape_cast %132 : vector<1x64xf32> to vector<1x1x64xf32>
    %138 = vector.shape_cast %137 : vector<1x1x64xf32> to vector<1x1x64xf32>
    %139 = vector.broadcast %138 : vector<1x1x64xf32> to vector<1x8x64xf32>
    %140 = vector.shape_cast %139 : vector<1x8x64xf32> to vector<8x64xf32>
    %141 = arith.mulf %132, %133 : vector<1x64xf32>
    %cst_47 = arith.constant dense<0.000000e+00> : vector<1x4xf32>
    %142 = tpu.matmul %141, %0, %cst_47 {dimension_numbers = #tpu.dot_dimension_numbers<[1], [0], [0], [1], [0, 0, 1, 1], [], []>} : vector<1x64xf32>, vector<64x4xf32>, vector<1x4xf32> -> vector<1x4xf32>
    %143 = vector.shape_cast %142 : vector<1x4xf32> to vector<1x1x4xf32>
    %144 = arith.mulf %140, %135 : vector<8x64xf32>
    %cst_48 = arith.constant dense<0.000000e+00> : vector<8x4xf32>
    %145 = tpu.matmul %144, %0, %cst_48 {dimension_numbers = #tpu.dot_dimension_numbers<[1], [0], [0], [1], [0, 0, 1, 1], [], []>} : vector<8x64xf32>, vector<64x4xf32>, vector<8x4xf32> -> vector<8x4xf32>
    %146 = vector.shape_cast %145 : vector<8x4xf32> to vector<1x8x4xf32>
    %cst_49 = arith.constant 5.000000e-01 : f32
    %147 = vector.broadcast %cst_49 : f32 to vector<1x8x1xf32>
    %148 = arith.cmpf ogt, %12, %147 : vector<1x8x1xf32>
    %cst_50 = arith.constant -1.000000e+30 : f32
    %149 = vector.shape_cast %148 : vector<1x8x1xi1> to vector<1x8x1xi1>
    %150 = vector.broadcast %149 : vector<1x8x1xi1> to vector<1x8x4xi1>
    %151 = vector.broadcast %cst_50 : f32 to vector<1x8x4xf32>
    %152 = arith.select %150, %151, %146 : vector<1x8x4xi1>, vector<1x8x4xf32>
    %cst_51 = arith.constant dense<0xFF800000> : vector<1x4xf32>
    %153 = vector.multi_reduction <maximumf>, %152, %cst_51 [1] : vector<1x8x4xf32> to vector<1x4xf32>
    %154 = vector.shape_cast %153 : vector<1x4xf32> to vector<1x1x4xf32>
    %155 = arith.maximumf %143, %154 : vector<1x1x4xf32>
    %156 = arith.subf %143, %155 : vector<1x1x4xf32>
    %157 = math.exp %156 : vector<1x1x4xf32>
    %158 = vector.broadcast %155 : vector<1x1x4xf32> to vector<1x8x4xf32>
    %159 = arith.subf %152, %158 : vector<1x8x4xf32>
    %160 = math.exp %159 : vector<1x8x4xf32>
    %cst_52 = arith.constant dense<0.000000e+00> : vector<1x4xf32>
    %161 = vector.multi_reduction <add>, %160, %cst_52 [1] : vector<1x8x4xf32> to vector<1x4xf32>
    %162 = vector.shape_cast %161 : vector<1x4xf32> to vector<1x1x4xf32>
    %163 = arith.addf %157, %162 : vector<1x1x4xf32>
    %164 = tpu.reciprocal %163 {approx = true} : vector<1x1x4xf32> -> vector<1x1x4xf32>
    %165 = arith.mulf %157, %164 : vector<1x1x4xf32>
    %166 = vector.shape_cast %165 : vector<1x1x4xf32> to vector<1x4xf32>
    %167 = vector.broadcast %164 : vector<1x1x4xf32> to vector<1x8x4xf32>
    %168 = arith.mulf %160, %167 : vector<1x8x4xf32>
    %169 = vector.shape_cast %168 : vector<1x8x4xf32> to vector<8x4xf32>
    %cst_53 = arith.constant dense<0.000000e+00> : vector<1x64xf32>
    %170 = tpu.matmul %166, %1, %cst_53 {dimension_numbers = #tpu.dot_dimension_numbers<[1], [0], [0], [1], [0, 0, 1, 1], [], []>} : vector<1x4xf32>, vector<4x64xf32>, vector<1x64xf32> -> vector<1x64xf32>
    %171 = arith.mulf %170, %134 : vector<1x64xf32>
    %cst_54 = arith.constant dense<0.000000e+00> : vector<8x64xf32>
    %172 = tpu.matmul %169, %1, %cst_54 {dimension_numbers = #tpu.dot_dimension_numbers<[1], [0], [0], [1], [0, 0, 1, 1], [], []>} : vector<8x4xf32>, vector<4x64xf32>, vector<8x64xf32> -> vector<8x64xf32>
    %173 = arith.mulf %172, %136 : vector<8x64xf32>
    %174 = vector.shape_cast %173 : vector<8x64xf32> to vector<1x8x64xf32>
    %cst_55 = arith.constant dense<0.000000e+00> : vector<1x64xf32>
    %175 = vector.multi_reduction <add>, %174, %cst_55 [1] : vector<1x8x64xf32> to vector<1x64xf32>
    %176 = arith.addf %171, %175 : vector<1x64xf32>
    %c0_56 = arith.constant 0 : index
    %c0_57 = arith.constant 0 : index
    %c448 = arith.constant 448 : index
    %177 = vector.load %arg5[%c0_56, %c0_57, %c448] : memref<2x64x512xbf16, #tpu.memory_space<vmem>>, vector<1x64x64xbf16>
    %178 = vector.shape_cast %177 : vector<1x64x64xbf16> to vector<64x64xbf16>
    %179 = arith.truncf %176 : vector<1x64xf32> to vector<1x64xbf16>
    %cst_58 = arith.constant dense<0.000000e+00> : vector<1x64xf32>
    %180 = tpu.matmul %179, %178, %cst_58 {dimension_numbers = #tpu.dot_dimension_numbers<[1], [0], [0], [1], [0, 0, 1, 1], [], []>} : vector<1x64xbf16>, vector<64x64xbf16>, vector<1x64xf32> -> vector<1x64xf32>
    %c0_59 = arith.constant 0 : index
    %c448_60 = arith.constant 448 : index
    %181 = vector.load %arg6[%c0_59, %c448_60] : memref<2x640xf32, #tpu.memory_space<vmem>>, vector<1x64xf32>
    %182 = arith.addf %180, %181 : vector<1x64xf32>
    %cst_61 = arith.constant 0.000000e+00 : f32
    %183 = vector.broadcast %cst_61 : f32 to vector<1x64xf32>
    %184 = arith.cmpf ogt, %182, %183 : vector<1x64xf32>
    %cst_62 = arith.constant 0.00999999977 : f32
    %185 = vector.broadcast %cst_62 : f32 to vector<1x64xf32>
    %186 = arith.mulf %185, %182 : vector<1x64xf32>
    %187 = arith.select %184, %182, %186 : vector<1x64xi1>, vector<1x64xf32>
    %188 = vector.broadcast %13 : vector<8x1xf32> to vector<8x64xf32>
    %189 = arith.mulf %123, %188 : vector<8x64xf32>
    %c1 = arith.constant 1 : index
    %c512_63 = arith.constant 512 : index
    %190 = vector.load %arg6[%c1, %c512_63] : memref<2x640xf32, #tpu.memory_space<vmem>>, vector<1x64xf32>
    %c1_64 = arith.constant 1 : index
    %c576_65 = arith.constant 576 : index
    %191 = vector.load %arg6[%c1_64, %c576_65] : memref<2x640xf32, #tpu.memory_space<vmem>>, vector<1x64xf32>
    %cst_66 = arith.constant dense<0.000000e+00> : vector<8xf32>
    %192 = vector.multi_reduction <add>, %189, %cst_66 [1] : vector<8x64xf32> to vector<8xf32>
    %193 = vector.shape_cast %192 : vector<8xf32> to vector<8x1xf32>
    %cst_67 = arith.constant 6.400000e+01 : f32
    %194 = vector.broadcast %cst_67 : f32 to vector<8x1xf32>
    %195 = arith.divf %193, %194 : vector<8x1xf32>
    %196 = vector.broadcast %195 : vector<8x1xf32> to vector<8x64xf32>
    %197 = arith.subf %189, %196 : vector<8x64xf32>
    %198 = arith.mulf %197, %197 : vector<8x64xf32>
    %cst_68 = arith.constant dense<0.000000e+00> : vector<8xf32>
    %199 = vector.multi_reduction <add>, %198, %cst_68 [1] : vector<8x64xf32> to vector<8xf32>
    %200 = vector.shape_cast %199 : vector<8xf32> to vector<8x1xf32>
    %cst_69 = arith.constant 6.400000e+01 : f32
    %201 = vector.broadcast %cst_69 : f32 to vector<8x1xf32>
    %202 = arith.divf %200, %201 : vector<8x1xf32>
    %203 = vector.broadcast %195 : vector<8x1xf32> to vector<8x64xf32>
    %204 = arith.subf %189, %203 : vector<8x64xf32>
    %cst_70 = arith.constant 9.99999997E-7 : f32
    %205 = vector.broadcast %cst_70 : f32 to vector<8x1xf32>
    %206 = arith.addf %202, %205 : vector<8x1xf32>
    %207 = math.rsqrt %206 : vector<8x1xf32>
    %208 = vector.broadcast %207 : vector<8x1xf32> to vector<8x64xf32>
    %209 = arith.mulf %204, %208 : vector<8x64xf32>
    %210 = vector.broadcast %190 : vector<1x64xf32> to vector<8x64xf32>
    %211 = arith.mulf %209, %210 : vector<8x64xf32>
    %212 = vector.broadcast %191 : vector<1x64xf32> to vector<8x64xf32>
    %213 = arith.addf %211, %212 : vector<8x64xf32>
    %214 = tpu.concatenate %213, %32, %187 in 0 : vector<8x64xf32>, vector<8x64xf32>, vector<1x64xf32> -> vector<17x64xf32>
    %c1_71 = arith.constant 1 : index
    %c0_72 = arith.constant 0 : index
    %c0_73 = arith.constant 0 : index
    %215 = vector.load %arg5[%c1_71, %c0_72, %c0_73] : memref<2x64x512xbf16, #tpu.memory_space<vmem>>, vector<1x64x192xbf16>
    %216 = vector.shape_cast %215 : vector<1x64x192xbf16> to vector<64x192xbf16>
    %217 = arith.truncf %214 : vector<17x64xf32> to vector<17x64xbf16>
    %cst_74 = arith.constant dense<0.000000e+00> : vector<17x192xf32>
    %218 = tpu.matmul %217, %216, %cst_74 {dimension_numbers = #tpu.dot_dimension_numbers<[1], [0], [0], [1], [0, 0, 1, 1], [], []>} : vector<17x64xbf16>, vector<64x192xbf16>, vector<17x192xf32> -> vector<17x192xf32>
    %c1_75 = arith.constant 1 : index
    %c0_76 = arith.constant 0 : index
    %219 = vector.load %arg6[%c1_75, %c0_76] : memref<2x640xf32, #tpu.memory_space<vmem>>, vector<1x192xf32>
    %220 = vector.broadcast %219 : vector<1x192xf32> to vector<17x192xf32>
    %221 = arith.addf %218, %220 : vector<17x192xf32>
    %222 = vector.extract_strided_slice %221 {offsets = [0, 128], sizes = [8, 64], strides = [1, 1]} : vector<17x192xf32> to vector<8x64xf32>
    %223 = vector.extract_strided_slice %221 {offsets = [0, 0], sizes = [8, 128], strides = [1, 1]} : vector<17x192xf32> to vector<8x128xf32>
    %224 = vector.extract_strided_slice %221 {offsets = [8, 0], sizes = [8, 128], strides = [1, 1]} : vector<17x192xf32> to vector<8x128xf32>
    %225 = vector.extract_strided_slice %221 {offsets = [16, 0], sizes = [1, 128], strides = [1, 1]} : vector<17x192xf32> to vector<1x128xf32>
    %c1_i32_77 = arith.constant 1 : i32
    %226 = tpu.dynamic_rotate %223 by %c1_i32_77 dim 0 : vector<8x128xf32>, i32 -> vector<8x128xf32>
    %227 = vector.broadcast %19 : vector<8x1xf32> to vector<8x128xf32>
    %228 = arith.mulf %226, %227 : vector<8x128xf32>
    %c7_i32_78 = arith.constant 7 : i32
    %229 = tpu.dynamic_rotate %223 by %c7_i32_78 dim 0 : vector<8x128xf32>, i32 -> vector<8x128xf32>
    %230 = vector.broadcast %23 : vector<8x1xf32> to vector<8x128xf32>
    %231 = arith.mulf %229, %230 : vector<8x128xf32>
    %232 = vector.shape_cast %225 : vector<1x128xf32> to vector<1x1x128xf32>
    %233 = vector.shape_cast %232 : vector<1x1x128xf32> to vector<1x1x128xf32>
    %234 = vector.broadcast %233 : vector<1x1x128xf32> to vector<1x8x128xf32>
    %235 = vector.shape_cast %234 : vector<1x8x128xf32> to vector<8x128xf32>
    %236 = vector.shape_cast %228 : vector<8x128xf32> to vector<1x8x128xf32>
    %237 = vector.shape_cast %223 : vector<8x128xf32> to vector<1x8x128xf32>
    %238 = vector.shape_cast %231 : vector<8x128xf32> to vector<1x8x128xf32>
    %239 = vector.shape_cast %224 : vector<8x128xf32> to vector<1x8x128xf32>
    %240 = vector.shape_cast %235 : vector<8x128xf32> to vector<1x8x128xf32>
    %241 = tpu.concatenate %236, %237, %238, %239, %240 in 0 : vector<1x8x128xf32>, vector<1x8x128xf32>, vector<1x8x128xf32>, vector<1x8x128xf32>, vector<1x8x128xf32> -> vector<5x8x128xf32>
    %242 = vector.extract_strided_slice %241 {offsets = [0, 0, 0], sizes = [5, 8, 64], strides = [1, 1, 1]} : vector<5x8x128xf32> to vector<5x8x64xf32>
    %243 = vector.shape_cast %222 : vector<8x64xf32> to vector<1x8x64xf32>
    %244 = vector.broadcast %243 : vector<1x8x64xf32> to vector<5x8x64xf32>
    %245 = arith.mulf %242, %244 : vector<5x8x64xf32>
    %246 = vector.shape_cast %245 : vector<5x8x64xf32> to vector<40x64xf32>
    %cst_79 = arith.constant dense<0.000000e+00> : vector<40x4xf32>
    %247 = tpu.matmul %246, %0, %cst_79 {dimension_numbers = #tpu.dot_dimension_numbers<[1], [0], [0], [1], [0, 0, 1, 1], [], []>} : vector<40x64xf32>, vector<64x4xf32>, vector<40x4xf32> -> vector<40x4xf32>
    %248 = vector.shape_cast %247 : vector<40x4xf32> to vector<5x8x4xf32>
    %cst_80 = arith.constant dense<0xFF800000> : vector<8x4xf32>
    %249 = vector.multi_reduction <maximumf>, %248, %cst_80 [0] : vector<5x8x4xf32> to vector<8x4xf32>
    %250 = vector.shape_cast %249 : vector<8x4xf32> to vector<1x8x4xf32>
    %251 = vector.broadcast %250 : vector<1x8x4xf32> to vector<5x8x4xf32>
    %252 = arith.subf %248, %251 : vector<5x8x4xf32>
    %253 = math.exp %252 : vector<5x8x4xf32>
    %cst_81 = arith.constant dense<0.000000e+00> : vector<8x4xf32>
    %254 = vector.multi_reduction <add>, %253, %cst_81 [0] : vector<5x8x4xf32> to vector<8x4xf32>
    %255 = vector.shape_cast %254 : vector<8x4xf32> to vector<1x8x4xf32>
    %256 = tpu.reciprocal %255 {approx = true} : vector<1x8x4xf32> -> vector<1x8x4xf32>
    %257 = vector.broadcast %256 : vector<1x8x4xf32> to vector<5x8x4xf32>
    %258 = arith.mulf %253, %257 : vector<5x8x4xf32>
    %259 = vector.shape_cast %258 : vector<5x8x4xf32> to vector<40x4xf32>
    %cst_82 = arith.constant dense<0.000000e+00> : vector<40x64xf32>
    %260 = tpu.matmul %259, %1, %cst_82 {dimension_numbers = #tpu.dot_dimension_numbers<[1], [0], [0], [1], [0, 0, 1, 1], [], []>} : vector<40x4xf32>, vector<4x64xf32>, vector<40x64xf32> -> vector<40x64xf32>
    %261 = vector.shape_cast %260 : vector<40x64xf32> to vector<5x8x64xf32>
    %262 = vector.extract_strided_slice %241 {offsets = [0, 0, 64], sizes = [5, 8, 64], strides = [1, 1, 1]} : vector<5x8x128xf32> to vector<5x8x64xf32>
    %263 = arith.mulf %261, %262 : vector<5x8x64xf32>
    %cst_83 = arith.constant dense<0.000000e+00> : vector<8x64xf32>
    %264 = vector.multi_reduction <add>, %263, %cst_83 [0] : vector<5x8x64xf32> to vector<8x64xf32>
    %c1_84 = arith.constant 1 : index
    %c0_85 = arith.constant 0 : index
    %c192_86 = arith.constant 192 : index
    %265 = vector.load %arg5[%c1_84, %c0_85, %c192_86] : memref<2x64x512xbf16, #tpu.memory_space<vmem>>, vector<1x64x64xbf16>
    %266 = vector.shape_cast %265 : vector<1x64x64xbf16> to vector<64x64xbf16>
    %267 = arith.truncf %264 : vector<8x64xf32> to vector<8x64xbf16>
    %cst_87 = arith.constant dense<0.000000e+00> : vector<8x64xf32>
    %268 = tpu.matmul %267, %266, %cst_87 {dimension_numbers = #tpu.dot_dimension_numbers<[1], [0], [0], [1], [0, 0, 1, 1], [], []>} : vector<8x64xbf16>, vector<64x64xbf16>, vector<8x64xf32> -> vector<8x64xf32>
    %c1_88 = arith.constant 1 : index
    %c192_89 = arith.constant 192 : index
    %269 = vector.load %arg6[%c1_88, %c192_89] : memref<2x640xf32, #tpu.memory_space<vmem>>, vector<1x64xf32>
    %270 = vector.broadcast %269 : vector<1x64xf32> to vector<8x64xf32>
    %271 = arith.addf %268, %270 : vector<8x64xf32>
    %cst_90 = arith.constant 0.000000e+00 : f32
    %272 = vector.broadcast %cst_90 : f32 to vector<8x64xf32>
    %273 = arith.cmpf ogt, %271, %272 : vector<8x64xf32>
    %cst_91 = arith.constant 0.00999999977 : f32
    %274 = vector.broadcast %cst_91 : f32 to vector<8x64xf32>
    %275 = arith.mulf %274, %271 : vector<8x64xf32>
    %276 = arith.select %273, %271, %275 : vector<8x64xi1>, vector<8x64xf32>
    %277 = vector.broadcast %13 : vector<8x1xf32> to vector<8x64xf32>
    %278 = arith.mulf %276, %277 : vector<8x64xf32>
    %c1_92 = arith.constant 1 : index
    %c0_93 = arith.constant 0 : index
    %c0_94 = arith.constant 0 : index
    %279 = vector.load %arg7[%c1_92, %c0_93, %c0_94] : memref<3x64x128xbf16, #tpu.memory_space<vmem>>, vector<1x64x64xbf16>
    %280 = vector.shape_cast %279 : vector<1x64x64xbf16> to vector<64x64xbf16>
    %281 = arith.truncf %278 : vector<8x64xf32> to vector<8x64xbf16>
    %cst_95 = arith.constant dense<0.000000e+00> : vector<8x64xf32>
    %282 = tpu.matmul %281, %280, %cst_95 {dimension_numbers = #tpu.dot_dimension_numbers<[1], [0], [0], [1], [0, 0, 1, 1], [], []>} : vector<8x64xbf16>, vector<64x64xbf16>, vector<8x64xf32> -> vector<8x64xf32>
    %c1_96 = arith.constant 1 : index
    %c0_97 = arith.constant 0 : index
    %283 = vector.load %arg8[%c1_96, %c0_97] : memref<3x128xf32, #tpu.memory_space<vmem>>, vector<1x64xf32>
    %284 = vector.broadcast %283 : vector<1x64xf32> to vector<8x64xf32>
    %285 = arith.addf %282, %284 : vector<8x64xf32>
    %cst_98 = arith.constant 0.000000e+00 : f32
    %286 = vector.broadcast %cst_98 : f32 to vector<8x64xf32>
    %287 = arith.cmpf ogt, %285, %286 : vector<8x64xf32>
    %cst_99 = arith.constant 0.00999999977 : f32
    %288 = vector.broadcast %cst_99 : f32 to vector<8x64xf32>
    %289 = arith.mulf %288, %285 : vector<8x64xf32>
    %290 = arith.select %287, %285, %289 : vector<8x64xi1>, vector<8x64xf32>
    %c2 = arith.constant 2 : index
    %c0_100 = arith.constant 0 : index
    %c0_101 = arith.constant 0 : index
    %291 = vector.load %arg7[%c2, %c0_100, %c0_101] : memref<3x64x128xbf16, #tpu.memory_space<vmem>>, vector<1x64x128xbf16>
    %292 = vector.shape_cast %291 : vector<1x64x128xbf16> to vector<64x128xbf16>
    %293 = arith.truncf %290 : vector<8x64xf32> to vector<8x64xbf16>
    %cst_102 = arith.constant dense<0.000000e+00> : vector<8x128xf32>
    %294 = tpu.matmul %293, %292, %cst_102 {dimension_numbers = #tpu.dot_dimension_numbers<[1], [0], [0], [1], [0, 0, 1, 1], [], []>} : vector<8x64xbf16>, vector<64x128xbf16>, vector<8x128xf32> -> vector<8x128xf32>
    %c2_103 = arith.constant 2 : index
    %c0_104 = arith.constant 0 : index
    %295 = vector.load %arg8[%c2_103, %c0_104] : memref<3x128xf32, #tpu.memory_space<vmem>>, vector<1x128xf32>
    %296 = vector.broadcast %295 : vector<1x128xf32> to vector<8x128xf32>
    %297 = arith.addf %294, %296 : vector<8x128xf32>
    %c0_105 = arith.constant 0 : index
    %c0_106 = arith.constant 0 : index
    %298 = vector.load %arg9[%c0_105, %c0_106] : memref<8x128xf32, #tpu.memory_space<vmem>>, vector<8x128xf32>
    tpu.vector_store %arg9[%c0_105, %c0_106], %297 {strides = array<i32>} : memref<8x128xf32, #tpu.memory_space<vmem>>, vector<8x128xf32>,
    return
  }
  func.func @transform_0(%arg0: i32, %arg1: memref<2xi32, #tpu.memory_space<smem>>) -> (i32, i32) {
    %c0_i32 = arith.constant 0 : i32
    %c0_i32_0 = arith.constant 0 : i32
    return %arg0, %c0_i32 : i32, i32
  }
  func.func @transform_1(%arg0: i32, %arg1: memref<2xi32, #tpu.memory_space<smem>>) -> (i32, i32) {
    %c0_i32 = arith.constant 0 : i32
    %c0_i32_0 = arith.constant 0 : i32
    %c0_i32_1 = arith.constant 0 : i32
    return %c0_i32, %c0_i32_0 : i32, i32
  }
  func.func @transform_2(%arg0: i32, %arg1: memref<2xi32, #tpu.memory_space<smem>>) -> (i32, i32) {
    %c0_i32 = arith.constant 0 : i32
    %c0_i32_0 = arith.constant 0 : i32
    %c0_i32_1 = arith.constant 0 : i32
    return %c0_i32, %c0_i32_0 : i32, i32
  }
  func.func @transform_3(%arg0: i32, %arg1: memref<2xi32, #tpu.memory_space<smem>>) -> (i32, i32, i32) {
    %c0_i32 = arith.constant 0 : i32
    %c0_i32_0 = arith.constant 0 : i32
    %c0_i32_1 = arith.constant 0 : i32
    %c0_i32_2 = arith.constant 0 : i32
    return %c0_i32, %c0_i32_0, %c0_i32_1 : i32, i32, i32
  }
  func.func @transform_4(%arg0: i32, %arg1: memref<2xi32, #tpu.memory_space<smem>>) -> (i32, i32) {
    %c0_i32 = arith.constant 0 : i32
    %c0_i32_0 = arith.constant 0 : i32
    %c0_i32_1 = arith.constant 0 : i32
    return %c0_i32, %c0_i32_0 : i32, i32
  }
  func.func @transform_5(%arg0: i32, %arg1: memref<2xi32, #tpu.memory_space<smem>>) -> (i32, i32, i32) {
    %c0_i32 = arith.constant 0 : i32
    %c0_i32_0 = arith.constant 0 : i32
    %c0_i32_1 = arith.constant 0 : i32
    %c0_i32_2 = arith.constant 0 : i32
    return %c0_i32, %c0_i32_0, %c0_i32_1 : i32, i32, i32
  }
  func.func @transform_6(%arg0: i32, %arg1: memref<2xi32, #tpu.memory_space<smem>>) -> (i32, i32) {
    %c0_i32 = arith.constant 0 : i32
    %c0_i32_0 = arith.constant 0 : i32
    %c0_i32_1 = arith.constant 0 : i32
    return %c0_i32, %c0_i32_0 : i32, i32
  }
  func.func @transform_7(%arg0: i32, %arg1: memref<2xi32, #tpu.memory_space<smem>>) -> (i32, i32) {
    %c0_i32 = arith.constant 0 : i32
    %c0_i32_0 = arith.constant 0 : i32
    return %arg0, %c0_i32 : i32, i32
  }
}

</mosaic_0001>

<llo_original>
// kernel: tpu_custom_call.1
$region0: #{tpu_custom_call.1}
  #allocation0 [shape = 'u32[]', space=smem, size = 0x4, offset = 0x4, fixed_abs, tag = 'smem constant byte address 0x4 - core index']
  #allocation1 [shape = 'u32[144,128]{1,0:T(1,128)}', space=vmem, size = 0x12000, scoped, tag = 'internal scratch']
  #allocation2 [shape = 's32[1]{0}', space=sflag, size = 0x4, scoped, tag = 'scoped memory for tpu_custom_call.1']
  #allocation3 [shape = 'u8[512]{0}', space=smem, size = 0x200, scoped, tag = 'prefetched SMEM operand 0']
  %s0 = inlined_call_operand.hbm [shape: s32[2], index: 0, kind: input, shape index: {}]
  %s1 = inlined_call_operand.hbm [shape: bf16[16,32], index: 1, kind: input, shape index: {}]
  %s2 = inlined_call_operand.hbm [shape: f32[8,64], index: 2, kind: input, shape index: {}]
  %s3 = inlined_call_operand.hbm [shape: f32[64,68], index: 3, kind: input, shape index: {}]
  %s4 = inlined_call_operand.hbm [shape: bf16[2,64,512], index: 4, kind: input, shape index: {}]
  %s5 = inlined_call_operand.hbm [shape: f32[2,640], index: 5, kind: input, shape index: {}]
  %s6 = inlined_call_operand.hbm [shape: bf16[3,64,128], index: 6, kind: input, shape index: {}]
  %s7 = inlined_call_operand.vmem [shape: f32[3,128], index: 7, kind: input, shape index: {}]
  %s8 = inlined_call_operand.hbm [shape: f32[16,128], index: 8, kind: output, shape index: {}]
  %s9 = sld [smem:[#allocation0]]
  $region85: #{tpu_custom_call.1} parent=0
    _
  %s11 = ssub.s32 1, %s9
  %s12 = scalar_select 0, %s11, %s9
  %14 = dma.hbm_to_smem %s0, 16, [#allocation3], [#allocation2]
  %15 = dma.done [#allocation2], 16
  %16 = sfence
  $region1: #{tpu_custom_call.1} parent=0
    #allocation4 [shape = 'u8[4096]{0}', space=vmem, size = 0x1000, scoped, tag = 'input window, operand 1']
    #allocation5 [shape = 's32[2]{0}', space=sflag, size = 0x8, scoped, tag = 'scoped memory for tpu_custom_call.1']
    #allocation6 [shape = 's32[2]{0}', space=sflag, size = 0x8, scoped, tag = 'scoped memory for tpu_custom_call.1']
    #allocation7 [shape = 'u8[4096]{0}', space=vmem, size = 0x1000, scoped, tag = 'input window, operand 2, single buffered']
    #allocation8 [shape = 's32[1]{0}', space=sflag, size = 0x4, scoped, tag = 'scoped memory for tpu_custom_call.1']
    #allocation9 [shape = 'u8[32768]{0}', space=vmem, size = 0x8000, scoped, tag = 'input window, operand 3, single buffered']
    #allocation10 [shape = 'u8[131072]{0}', space=vmem, size = 0x20000, scoped, tag = 'input window, operand 4, single buffered']
    #allocation11 [shape = 's32[1]{0}', space=sflag, size = 0x4, scoped, tag = 'scoped memory for tpu_custom_call.1']
    #allocation12 [shape = 'u8[5120]{0}', space=vmem, size = 0x1400, scoped, tag = 'input window, operand 5, single buffered']
    #allocation13 [shape = 'u8[49152]{0}', space=vmem, size = 0xc000, scoped, tag = 'input window, operand 6, single buffered']
    #allocation14 [shape = 's32[1]{0}', space=sflag, size = 0x4, scoped, tag = 'scoped memory for tpu_custom_call.1']
    #allocation15 [shape = 'u8[8192]{0}', space=vmem, size = 0x2000, scoped, tag = 'output window, operand 0']
    %17 = vsyncpa [#allocation5], 0
    %s18 = scalar_lea.sflag [#allocation5], 1
    %19 = vsyncpa %s18, 0
    %20 = vsyncpa [#allocation8], 0
    %21 = vsyncpa [#allocation11], 0
    %22 = vsyncpa [#allocation14], 0
    %23 = vsyncpa [#allocation6], 0
    %s24 = scalar_lea.sflag [#allocation6], 1
    %25 = vsyncpa %s24, 0
    loop: start=0, step=1, limit=4
    $region2: #{tpu_custom_call.1} parent=1 // loop_pre_header
      _
    $region3: #{tpu_custom_call.1} parent=1 // loop_header
      %s27 = sphi 0, %s31
      %p28 = scmp.ge.s32.totalorder %s27, 4
      %s37 = sphi 0, %s39
      %s40 = sphi 0, %s37
      %s41 = sphi 0, %s40
      %s57 = sphi 0, %s41
      %s61 = sphi 0, %s61
      %s63 = sphi 0, %s61
      %s64 = sphi 0, %s63
      %s78 = sphi 0, %s64
      %s82 = sphi 0, %s82
      %s84 = sphi 0, %s82
      %s85 = sphi 0, %s84
      %s99 = sphi 0, %s85
      %s103 = sphi 0, %s103
      %s105 = sphi 0, %s103
      %s106 = sphi 0, %s105
      %s120 = sphi 0, %s106
      %s124 = sphi 0, %s124
      %s126 = sphi 0, %s124
      %s127 = sphi 0, %s126
      %s141 = sphi 0, %s127
      %s145 = sphi 0, %s145
      %s147 = sphi 0, %s145
      %s148 = sphi 0, %s147
      %s162 = sphi 0, %s148
      %s166 = sphi 0, %s166
      %s168 = sphi 0, %s166
      %s169 = sphi 0, %s168
      %s183 = sphi 0, %s169
      %s189 = sphi 0, %s191
      %s192 = sphi 0, %s189
      %s193 = sphi 0, %s192
      %s209 = sphi 0, %s193
    $region4: #{tpu_custom_call.1} parent=1 // loop_header_branch
      %30 = sbr.rel (%p28) target = $region8
    $region5: #{tpu_custom_call.1} parent=1 // loop_body
      %s32 = ssub.s32 %s27, 1
      %s33 = ssub.s32 %s27, 2
      %s34 = sadd.s32 %s27, 1
      %s35 = ssub.s32 %s27, %s34
      %p36 = scmp.eq.s32.totalorder %s35, 0
      %s38 = sadd.s32 %s37, 1
      %s39 = scalar_select %p36, %s37, %s38
      %p42 = pneg %p36
      %p43 = scmp.eq.s32.totalorder %s27, 1
      %p44 = por %p42, %p43
      %p45 = scmp.ne.s32.totalorder %s37, %s40
      %p46 = scmp.eq.s32.totalorder %s27, 0
      %p47 = por %p45, %p46
      %p48 = scmp.ne.s32.totalorder %s37, %s40
      %p49 = scmp.eq.s32.totalorder %s32, 1
      %p50 = por %p48, %p49
      %p51 = scmp.ne.s32.totalorder %s40, %s41
      %p52 = scmp.eq.s32.totalorder %s32, 0
      %p53 = por %p51, %p52
      %p54 = scmp.ne.s32.totalorder %s40, %s41
      %p55 = scmp.eq.s32.totalorder %s33, 1
      %p56 = por %p54, %p55
      %p58 = scmp.ne.s32.totalorder %s41, %s57
      %p59 = scmp.eq.s32.totalorder %s33, 0
      %p60 = por %p58, %p59
      %s62 = sadd.s32 %s61, 1
      %p65 = scmp.eq.s32.totalorder %s27, 1
      %p66 = scmp.ne.s32.totalorder %s61, %s63
      %p67 = scmp.eq.s32.totalorder %s27, 0
      %p68 = por %p66, %p67
      %p69 = scmp.ne.s32.totalorder %s61, %s63
      %p70 = scmp.eq.s32.totalorder %s32, 1
      %p71 = por %p69, %p70
      %p72 = scmp.ne.s32.totalorder %s63, %s64
      %p73 = scmp.eq.s32.totalorder %s32, 0
      %p74 = por %p72, %p73
      %p75 = scmp.ne.s32.totalorder %s63, %s64
      %p76 = scmp.eq.s32.totalorder %s33, 1
      %p77 = por %p75, %p76
      %p79 = scmp.ne.s32.totalorder %s64, %s78
      %p80 = scmp.eq.s32.totalorder %s33, 0
      %p81 = por %p79, %p80
      %s83 = sadd.s32 %s82, 1
      %p86 = scmp.eq.s32.totalorder %s27, 1
      %p87 = scmp.ne.s32.totalorder %s82, %s84
      %p88 = scmp.eq.s32.totalorder %s27, 0
      %p89 = por %p87, %p88
      %p90 = scmp.ne.s32.totalorder %s82, %s84
      %p91 = scmp.eq.s32.totalorder %s32, 1
      %p92 = por %p90, %p91
      %p93 = scmp.ne.s32.totalorder %s84, %s85
      %p94 = scmp.eq.s32.totalorder %s32, 0
      %p95 = por %p93, %p94
      %p96 = scmp.ne.s32.totalorder %s84, %s85
      %p97 = scmp.eq.s32.totalorder %s33, 1
      %p98 = por %p96, %p97
      %p100 = scmp.ne.s32.totalorder %s85, %s99
      %p101 = scmp.eq.s32.totalorder %s33, 0
      %p102 = por %p100, %p101
      %s104 = sadd.s32 %s103, 1
      %p107 = scmp.eq.s32.totalorder %s27, 1
      %p108 = scmp.ne.s32.totalorder %s103, %s105
      %p109 = scmp.eq.s32.totalorder %s27, 0
      %p110 = por %p108, %p109
      %p111 = scmp.ne.s32.totalorder %s103, %s105
      %p112 = scmp.eq.s32.totalorder %s32, 1
      %p113 = por %p111, %p112
      %p114 = scmp.ne.s32.totalorder %s105, %s106
      %p115 = scmp.eq.s32.totalorder %s32, 0
      %p116 = por %p114, %p115
      %p117 = scmp.ne.s32.totalorder %s105, %s106
      %p118 = scmp.eq.s32.totalorder %s33, 1
      %p119 = por %p117, %p118
      %p121 = scmp.ne.s32.totalorder %s106, %s120
      %p122 = scmp.eq.s32.totalorder %s33, 0
      %p123 = por %p121, %p122
      %s125 = sadd.s32 %s124, 1
      %p128 = scmp.eq.s32.totalorder %s27, 1
      %p129 = scmp.ne.s32.totalorder %s124, %s126
      %p130 = scmp.eq.s32.totalorder %s27, 0
      %p131 = por %p129, %p130
      %p132 = scmp.ne.s32.totalorder %s124, %s126
      %p133 = scmp.eq.s32.totalorder %s32, 1
      %p134 = por %p132, %p133
      %p135 = scmp.ne.s32.totalorder %s126, %s127
      %p136 = scmp.eq.s32.totalorder %s32, 0
      %p137 = por %p135, %p136
      %p138 = scmp.ne.s32.totalorder %s126, %s127
      %p139 = scmp.eq.s32.totalorder %s33, 1
      %p140 = por %p138, %p139
      %p142 = scmp.ne.s32.totalorder %s127, %s141
      %p143 = scmp.eq.s32.totalorder %s33, 0
      %p144 = por %p142, %p143
      %s146 = sadd.s32 %s145, 1
      %p149 = scmp.eq.s32.totalorder %s27, 1
      %p150 = scmp.ne.s32.totalorder %s145, %s147
      %p151 = scmp.eq.s32.totalorder %s27, 0
      %p152 = por %p150, %p151
      %p153 = scmp.ne.s32.totalorder %s145, %s147
      %p154 = scmp.eq.s32.totalorder %s32, 1
      %p155 = por %p153, %p154
      %p156 = scmp.ne.s32.totalorder %s147, %s148
      %p157 = scmp.eq.s32.totalorder %s32, 0
      %p158 = por %p156, %p157
      %p159 = scmp.ne.s32.totalorder %s147, %s148
      %p160 = scmp.eq.s32.totalorder %s33, 1
      %p161 = por %p159, %p160
      %p163 = scmp.ne.s32.totalorder %s148, %s162
      %p164 = scmp.eq.s32.totalorder %s33, 0
      %p165 = por %p163, %p164
      %s167 = sadd.s32 %s166, 1
      %p170 = scmp.eq.s32.totalorder %s27, 1
      %p171 = scmp.ne.s32.totalorder %s166, %s168
      %p172 = scmp.eq.s32.totalorder %s27, 0
      %p173 = por %p171, %p172
      %p174 = scmp.ne.s32.totalorder %s166, %s168
      %p175 = scmp.eq.s32.totalorder %s32, 1
      %p176 = por %p174, %p175
      %p177 = scmp.ne.s32.totalorder %s168, %s169
      %p178 = scmp.eq.s32.totalorder %s32, 0
      %p179 = por %p177, %p178
      %p180 = scmp.ne.s32.totalorder %s168, %s169
      %p181 = scmp.eq.s32.totalorder %s33, 1
      %p182 = por %p180, %p181
      %p184 = scmp.ne.s32.totalorder %s169, %s183
      %p185 = scmp.eq.s32.totalorder %s33, 0
      %p186 = por %p184, %p185
      %s187 = ssub.s32 %s27, %s34
      %p188 = scmp.eq.s32.totalorder %s187, 0
      %s190 = sadd.s32 %s189, 1
      %s191 = scalar_select %p188, %s189, %s190
      %p194 = pneg %p188
      %p195 = scmp.eq.s32.totalorder %s27, 1
      %p196 = por %p194, %p195
      %p197 = scmp.ne.s32.totalorder %s189, %s192
      %p198 = scmp.eq.s32.totalorder %s27, 0
      %p199 = por %p197, %p198
      %p200 = scmp.ne.s32.totalorder %s189, %s192
      %p201 = scmp.eq.s32.totalorder %s32, 1
      %p202 = por %p200, %p201
      %p203 = scmp.ne.s32.totalorder %s192, %s193
      %p204 = scmp.eq.s32.totalorder %s32, 0
      %p205 = por %p203, %p204
      %p206 = scmp.ne.s32.totalorder %s192, %s193
      %p207 = scmp.eq.s32.totalorder %s33, 1
      %p208 = por %p206, %p207
      %p210 = scmp.ne.s32.totalorder %s193, %s209
      %p211 = scmp.eq.s32.totalorder %s33, 0
      %p212 = por %p210, %p211
      %p213 = scmp.le.s32.totalorder 1, %s27
      %p214 = scmp.lt.s32.totalorder %s27, 3
      %p215 = pnand %p213, %p214
      %p216 = pneg %p215
      // Predicated region
      $region9: #{tpu_custom_call.1} parent=5 // pred_check
        _
      $region10: #{tpu_custom_call.1} parent=5 // pred_check_branch
        %218 = sbr.rel (%p215) target = $region12
      $region11: #{tpu_custom_call.1} parent=5 // pred_region
        %s219 = ssub.s32 %s27, 1
        // Predicated region
        $region13: #{tpu_custom_call.1} parent=11 // pred_check
          %p220 = pneg %p74
        $region14: #{tpu_custom_call.1} parent=11 // pred_check_branch
          %222 = sbr.rel (%p220) target = $region16
        $region15: #{tpu_custom_call.1} parent=11 // pred_region
          %s224 = ssub.s32 128, 128
          %225 = vsyncadd [#allocation8], %s224
          %s227 = sshll.u32 [#allocation7], 4
          %s228 = int_to_ptr.vmem [resolvable:$true] %s227
          %230 = dma.hbm_to_vmem [thread:$0]  %s2, 128, %s228, [#allocation8]
        $region16: #{tpu_custom_call.1} parent=11 // pred_fallthru
          _
        // Predicated region
        $region17: #{tpu_custom_call.1} parent=11 // pred_check
          %p231 = pneg %p95
        $region18: #{tpu_custom_call.1} parent=11 // pred_check_branch
          %233 = sbr.rel (%p231) target = $region20
        $region19: #{tpu_custom_call.1} parent=11 // pred_region
          %s235 = ssub.s32 1024, 1024
          %236 = vsyncadd [#allocation8], %s235
          %s237 = sshll.u32 [#allocation9], 4
          %s238 = int_to_ptr.vmem [resolvable:$true] %s237
          %243 = dma.hbm_to_vmem [thread:$0]  %s3, 1024, %s238, [#allocation8], 128, 128, 8
        $region20: #{tpu_custom_call.1} parent=11 // pred_fallthru
          _
        // Predicated region
        $region21: #{tpu_custom_call.1} parent=11 // pred_check
          %p244 = pneg %p116
        $region22: #{tpu_custom_call.1} parent=11 // pred_check_branch
          %246 = sbr.rel (%p244) target = $region24
        $region23: #{tpu_custom_call.1} parent=11 // pred_region
          %s248 = ssub.s32 4096, 4096
          %249 = vsyncadd [#allocation11], %s248
          %s250 = sshll.u32 [#allocation10], 4
          %s251 = int_to_ptr.vmem [resolvable:$true] %s250
          %256 = dma.hbm_to_vmem [thread:$0]  %s4, 4096, %s251, [#allocation11], 256, 256, 16
        $region24: #{tpu_custom_call.1} parent=11 // pred_fallthru
          _
        // Predicated region
        $region25: #{tpu_custom_call.1} parent=11 // pred_check
          %p257 = pneg %p137
        $region26: #{tpu_custom_call.1} parent=11 // pred_check_branch
          %259 = sbr.rel (%p257) target = $region28
        $region27: #{tpu_custom_call.1} parent=11 // pred_region
          %s261 = ssub.s32 160, 160
          %262 = vsyncadd [#allocation11], %s261
          %s264 = sshll.u32 [#allocation12], 4
          %s265 = int_to_ptr.vmem [resolvable:$true] %s264
          %267 = dma.hbm_to_vmem [thread:$0]  %s5, 160, %s265, [#allocation11]
        $region28: #{tpu_custom_call.1} parent=11 // pred_fallthru
          _
        // Predicated region
        $region29: #{tpu_custom_call.1} parent=11 // pred_check
          %p268 = pneg %p158
        $region30: #{tpu_custom_call.1} parent=11 // pred_check_branch
          %270 = sbr.rel (%p268) target = $region32
        $region31: #{tpu_custom_call.1} parent=11 // pred_region
          %s272 = ssub.s32 1536, 1536
          %273 = vsyncadd [#allocation14], %s272
          %s274 = sshll.u32 [#allocation13], 4
          %s275 = int_to_ptr.vmem [resolvable:$true] %s274
          %280 = dma.hbm_to_vmem [thread:$0]  %s6, 1536, %s275, [#allocation14], 64, 64, 4
        $region32: #{tpu_custom_call.1} parent=11 // pred_fallthru
          _
        // Predicated region
        $region33: #{tpu_custom_call.1} parent=11 // pred_check
          %p281 = pneg %p179
        $region34: #{tpu_custom_call.1} parent=11 // pred_check_branch
          %283 = sbr.rel (%p281) target = $region36
        $region35: #{tpu_custom_call.1} parent=11 // pred_region
          _
        $region36: #{tpu_custom_call.1} parent=11 // pred_fallthru
          _
      $region12: #{tpu_custom_call.1} parent=5 // pred_fallthru
        _
      %p284 = scmp.lt.s32.totalorder %s27, 2
      // Predicated region
      $region37: #{tpu_custom_call.1} parent=5 // pred_check
        %p285 = pneg %p284
      $region38: #{tpu_custom_call.1} parent=5 // pred_check_branch
        %287 = sbr.rel (%p285) target = $region40
      $region39: #{tpu_custom_call.1} parent=5 // pred_region
        // Predicated region
        $region41: #{tpu_custom_call.1} parent=39 // pred_check
          %p288 = pneg %p47
        $region42: #{tpu_custom_call.1} parent=39 // pred_check_branch
          %290 = sbr.rel (%p288) target = $region44
        $region43: #{tpu_custom_call.1} parent=39 // pred_region
          %s291 = sand.u32 %s37, 1
          %s292 = scalar_lea.sflag [#allocation5], %s291
          %s293 = sand.u32 %s37, 1
          %s294 = smul.addr %s293, 4
          %s295 = scalar_lea.vmem [#allocation4], %s294
          %s297 = ssub.s32 64, 64
          %298 = vsyncadd %s292, %s297
          %s299 = smul.addr %s27, 64
          %s300 = scalar_lea.hbm %s1, %s299
          %s302 = sshll.u32 %s295, 4
          %s303 = int_to_ptr.vmem [resolvable:$true] %s302
          %305 = dma.hbm_to_vmem [thread:$0]  %s300, 64, %s303, %s292
        $region44: #{tpu_custom_call.1} parent=39 // pred_fallthru
          _
      $region40: #{tpu_custom_call.1} parent=5 // pred_fallthru
        _
      %p306 = scmp.le.s32.totalorder 1, %s27
      %p307 = scmp.lt.s32.totalorder %s27, 3
      %p308 = pnand %p306, %p307
      %p309 = pneg %p308
      // Predicated region
      $region45: #{tpu_custom_call.1} parent=5 // pred_check
        _
      $region46: #{tpu_custom_call.1} parent=5 // pred_check_branch
        %311 = sbr.rel (%p308) target = $region48
      $region47: #{tpu_custom_call.1} parent=5 // pred_region
        %s312 = ssub.s32 %s27, 1
        %s313 = sand.u32 %s40, 1
        %s314 = scalar_lea.sflag [#allocation5], %s313
        %s315 = sand.u32 %s40, 1
        %s316 = smul.addr %s315, 4
        %s317 = scalar_lea.vmem [#allocation4], %s316
        // Predicated region
        $region49: #{tpu_custom_call.1} parent=47 // pred_check
          %p318 = pneg %p53
        $region50: #{tpu_custom_call.1} parent=47 // pred_check_branch
          %320 = sbr.rel (%p318) target = $region52
        $region51: #{tpu_custom_call.1} parent=47 // pred_region
          %321 = dma.done %s314, 64
        $region52: #{tpu_custom_call.1} parent=47 // pred_fallthru
          _
        // Predicated region
        $region53: #{tpu_custom_call.1} parent=47 // pred_check
          %p322 = pneg %p74
        $region54: #{tpu_custom_call.1} parent=47 // pred_check_branch
          %324 = sbr.rel (%p322) target = $region56
        $region55: #{tpu_custom_call.1} parent=47 // pred_region
          %325 = dma.done [#allocation8], 128
        $region56: #{tpu_custom_call.1} parent=47 // pred_fallthru
          _
        // Predicated region
        $region57: #{tpu_custom_call.1} parent=47 // pred_check
          %p326 = pneg %p95
        $region58: #{tpu_custom_call.1} parent=47 // pred_check_branch
          %328 = sbr.rel (%p326) target = $region60
        $region59: #{tpu_custom_call.1} parent=47 // pred_region
          %329 = dma.done [#allocation8], 1024
        $region60: #{tpu_custom_call.1} parent=47 // pred_fallthru
          _
        // Predicated region
        $region61: #{tpu_custom_call.1} parent=47 // pred_check
          %p330 = pneg %p116
        $region62: #{tpu_custom_call.1} parent=47 // pred_check_branch
          %332 = sbr.rel (%p330) target = $region64
        $region63: #{tpu_custom_call.1} parent=47 // pred_region
          %333 = dma.done [#allocation11], 4096
        $region64: #{tpu_custom_call.1} parent=47 // pred_fallthru
          _
        // Predicated region
        $region65: #{tpu_custom_call.1} parent=47 // pred_check
          %p334 = pneg %p137
        $region66: #{tpu_custom_call.1} parent=47 // pred_check_branch
          %336 = sbr.rel (%p334) target = $region68
        $region67: #{tpu_custom_call.1} parent=47 // pred_region
          %337 = dma.done [#allocation11], 160
        $region68: #{tpu_custom_call.1} parent=47 // pred_fallthru
          _
        // Predicated region
        $region69: #{tpu_custom_call.1} parent=47 // pred_check
          %p338 = pneg %p158
        $region70: #{tpu_custom_call.1} parent=47 // pred_check_branch
          %340 = sbr.rel (%p338) target = $region72
        $region71: #{tpu_custom_call.1} parent=47 // pred_region
          %341 = dma.done [#allocation14], 1536
        $region72: #{tpu_custom_call.1} parent=47 // pred_fallthru
          _
        %s342 = sand.u32 %s40, 1
        %s343 = scalar_lea.sflag [#allocation5], %s342
        %s344 = sand.u32 %s40, 1
        %s345 = smul.addr %s344, 4
        %s346 = scalar_lea.vmem [#allocation4], %s345
        %p347 = pneg %p53
        %p348 = pneg %p50
        %p349 = pneg %p74
        %p350 = pneg %p71
        %p351 = pneg %p95
        %p352 = pneg %p92
        %p353 = pneg %p116
        %p354 = pneg %p113
        %p355 = pneg %p137
        %p356 = pneg %p134
        %p357 = pneg %p158
        %p358 = pneg %p155
        %p359 = pneg %p179
        %p360 = pneg %p176
        %p361 = pneg %p205
        %p362 = pneg %p202
        %s363 = sand.u32 %s192, 1
        %s364 = scalar_lea.sflag [#allocation6], %s363
        %s365 = sand.u32 %s192, 1
        %s366 = smul.addr %s365, 8
        %s367 = scalar_lea.vmem [#allocation15], %s366
        %v369 = vld [vmem:[#allocation9] sm:$0xff]
        %v370 = vld [vmem:[#allocation9 + $0x8] sm:$0xff]
        %v371 = vld [vmem:[#allocation9 + $0x10] sm:$0xff]
        %v372 = vld [vmem:[#allocation9 + $0x18] sm:$0xff]
        %v373 = vld [vmem:[#allocation9 + $0x20] sm:$0xff]
        %v374 = vld [vmem:[#allocation9 + $0x28] sm:$0xff]
        %v375 = vld [vmem:[#allocation9 + $0x30] sm:$0xff]
        %v376 = vld [vmem:[#allocation9 + $0x38] sm:$0xff]
        %v377 = vld [vmem:[#allocation9] sm:$0xf]
        %v378 = vlaneseq
        %v379 = vshrl.u32 %v378, 7
        %s380 = sld [smem:[#allocation3 + %s32]]
        %v381 = vstv %s380
        %vm382 = vcmp.lt.s32.totalorder %v379, %v381
        %v383 = vsel %vm382, 1, 0
        %v384 = vcvt.s32.f32 %v383
        %v385 = vsub.f32 1.0, %v384
        %vm386 = vcmp.gt.s32.totalorder %v379, 0
        %v387 = vsel %vm386, 1, 0
        %v388 = vcvt.s32.f32 %v387
        %vm389 = vcmp.lt.s32.totalorder %v379, 7
        %v390 = vsel %vm389, 1, 0
        %v391 = vcvt.s32.f32 %v390
        %v392 = vld [vmem:[%s317] sm:$0xf]
        %v393 = vld [vmem:[#allocation13] sm:$0xf]
        %v394 = vld [vmem:[#allocation13 + $0x4] sm:$0xf]
        %v395 = vld [vmem:[#allocation13 + $0x8] sm:$0xf]
        %v396 = vld [vmem:[#allocation13 + $0xc] sm:$0xf]
        %v397 = vld [vmem:[%s7] sm:$0x1]
        %v398 = vlaneseq
        %v399 = vshrl.u32 %v398, 7
        %v400 = vsub.s32 0, %v399
        %v401 = vrot.slane %v397, %v400
        %v406 = vunpack.c.l.b16 %v393
        %v407 = vunpack.c.l.b16 %v394
        %v408 = vunpack.c.l.b16 %v395
        %v409 = vunpack.c.l.b16 %v396
        %v410 = vpack.c.b16 %v407, %v406
        %v411 = vpack.c.b16 %v409, %v408
        %vm414 = vcmask 261120
        %v416 = vsel %vm414, %v392, 0
        %418 = vmatprep.subr.bf16.mxu0 0
        %419 = vmatpush1.bf16.msra.mxu0 0
        %420 = vmatprep.subr.bf16.mxu0 0
        %421 = vmatpush1.bf16.msra.mxu0 0
        %422 = vmatprep.subr.bf16.mxu0 0
        %423 = vmatpush1.bf16.msra.mxu0 0
        %424 = vmatprep.subr.bf16.mxu0 0
        %425 = vmatpush1.bf16.msra.mxu0 0
        %426 = vmatprep.subr.bf16.mxu0 0
        %427 = vmatpush1.bf16.msra.mxu0 0
        %428 = vmatprep.subr.bf16.mxu0 0
        %429 = vmatpush1.bf16.msra.mxu0 0
        %430 = vmatprep.subr.bf16.mxu0 0
        %431 = vmatpush1.bf16.msra.mxu0 %v411
        %432 = vmatprep.subr.bf16.mxu0 0
        %433 = vmatpush1.bf16.msra.mxu0 %v410
        %434 = vmatprep.subr.bf16.mxu0 0
        %435 = vmatpush2.bf16.msra.mxu0 0
        %436 = vmatprep.subr.bf16.mxu0 0
        %437 = vmatpush2.bf16.msra.mxu0 0
        %438 = vmatprep.subr.bf16.mxu0 0
        %439 = vmatpush2.bf16.msra.mxu0 0
        %440 = vmatprep.subr.bf16.mxu0 0
        %441 = vmatpush2.bf16.msra.mxu0 0
        %442 = vmatprep.subr.bf16.mxu0 0
        %443 = vmatpush2.bf16.msra.mxu0 0
        %444 = vmatprep.subr.bf16.mxu0 0
        %445 = vmatpush2.bf16.msra.mxu0 0
        %446 = vmatprep.subr.bf16.mxu0 0
        %447 = vmatpush2.bf16.msra.mxu0 0
        %448 = vmatprep.subr.bf16.mxu0 0
        %449 = vmatpush2.bf16.msra.mxu0 0
        %450 = vmatprep.mubr.bf16.mxu0 0
        %451 = vmatmul.mubr.bf16.gmra.mxu0 %v416
        %v452 = vpop.f32.mrf.mxu0
        %v453 = vadd.f32 %v401, %v452
        %v454 = vpop.f32.mrf.mxu0
        %v455 = vpop.f32.mrf.mxu0
        %v456 = vpop.f32.mrf.mxu0
        %457 = vdwg.mxu0
        %v458 = vld [vmem:[#allocation7] sm:$0xff]
        %v459 = vadd.f32 %v453, %v458
        %vm460 = vcmask 523264
        %v461 = vsel %vm460, %v459, 0.0
        %v462 = vrot.slane %v461, 4
        %v463 = vadd.f32 %v461, %v462
        %v464 = vrot.slane %v463, 2
        %v465 = vadd.f32 %v463, %v464
        %v466 = vrot.slane %v465, 1
        %v467 = vadd.f32 %v465, %v466
        %v468 = vrcp.pop 8.0
        %v469 = vmul.f32 %v467, %v468
        %v470 = vld [vmem:[#allocation12 + $0x8] sm:$0x1]
        %471 = vadd.xlane.f32.xlu0 %v461
        %v472 = vpop.xlane.xlu0 %471
        %v473 = vrcp.pop 64.0
        %v474 = vmul.f32 %v472, %v473
        %v475 = vsub.f32 %v459, %v474
        %v476 = vmul.f32 %v475, %v475
        %v477 = vsel %vm460, %v476, 0.0
        %478 = vadd.xlane.f32.xlu0 %v477
        %v479 = vpop.xlane.xlu0 %478
        %v480 = vmul.f32 %v479, %v473
        %v481 = vadd.f32 %v480, 1e-06
        %v482 = vrsqrt.pop %v481
        %v483 = vmul.f32 %v475, %v482
        %v484 = vlaneseq
        %v485 = vshrl.u32 %v484, 7
        %v486 = vsub.s32 0, %v485
        %v487 = vrot.slane %v470, %v486
        %v488 = vmul.f32 %v483, %v487
        %490 = vrot.lane.b32.xlu0 %v487, 64
        %v491 = vpop.permute.xlu0 %490
        %v493 = vadd.f32 %v488, %v491
        %v494 = vld [vmem:[#allocation10] sm:$0xff]
        %v495 = vld [vmem:[#allocation10 + $0x10] sm:$0xff]
        %v496 = vld [vmem:[#allocation10 + $0x20] sm:$0xff]
        %v497 = vld [vmem:[#allocation10 + $0x30] sm:$0xff]
        %v498 = vld [vmem:[#allocation10 + $0x40] sm:$0xff]
        %v499 = vld [vmem:[#allocation10 + $0x50] sm:$0xff]
        %v500 = vld [vmem:[#allocation10 + $0x60] sm:$0xff]
        %v501 = vld [vmem:[#allocation10 + $0x70] sm:$0xff]
        %v502 = vpack.c.bf16 %v459, %v493
        %v503 = vpack.c.bf16 %v469, %v469
        %v504 = vld [vmem:[#allocation12] ss:$2 sm:$0x3]
        %v506 = vlaneseq
        %v507 = vshrl.u32 %v506, 7
        %v508 = vsub.s32 0, %v507
        %v509 = vrot.slane %v504, %v508
        %v510 = vlaneseq
        %v511 = vshrl.u32 %v510, 7
        %v512 = vsub.s32 1, %v511
        %v513 = vrot.slane %v504, %v512
        %v524 = vunpack.c.l.b16 %v494
        %v525 = vunpack.c.h.b16 %v494
        %v526 = vunpack.c.l.b16 %v495
        %v527 = vunpack.c.h.b16 %v495
        %v528 = vunpack.c.l.b16 %v496
        %v529 = vunpack.c.h.b16 %v496
        %v530 = vunpack.c.l.b16 %v497
        %v531 = vunpack.c.h.b16 %v497
        %v532 = vunpack.c.l.b16 %v498
        %v533 = vunpack.c.h.b16 %v498
        %v534 = vunpack.c.l.b16 %v499
        %v535 = vunpack.c.h.b16 %v499
        %v536 = vunpack.c.l.b16 %v500
        %v537 = vunpack.c.h.b16 %v500
        %v538 = vunpack.c.l.b16 %v501
        %v539 = vunpack.c.h.b16 %v501
        %v540 = vpack.c.b16 %v526, %v524
        %v541 = vpack.c.b16 %v527, %v525
        %v542 = vpack.c.b16 %v530, %v528
        %v543 = vpack.c.b16 %v531, %v529
        %v544 = vpack.c.b16 %v534, %v532
        %v545 = vpack.c.b16 %v535, %v533
        %v546 = vpack.c.b16 %v538, %v536
        %v547 = vpack.c.b16 %v539, %v537
        %v557 = vsel %vm460, %v502, 0
        %v560 = vsel %vm460, %v503, 0
        %562 = vmatprep.subr.bf16.mxu0 0
        %563 = vmatpush1.bf16.msra.mxu0 0
        %564 = vmatprep.subr.bf16.mxu0 0
        %565 = vmatpush1.bf16.msra.mxu0 0
        %566 = vmatprep.subr.bf16.mxu0 0
        %567 = vmatpush1.bf16.msra.mxu0 0
        %568 = vmatprep.subr.bf16.mxu0 0
        %569 = vmatpush1.bf16.msra.mxu0 0
        %570 = vmatprep.subr.bf16.mxu0 %v547
        %571 = vmatpush1.bf16.msra.mxu0 %v546
        %572 = vmatprep.subr.bf16.mxu0 %v545
        %573 = vmatpush1.bf16.msra.mxu0 %v544
        %574 = vmatprep.subr.bf16.mxu0 %v543
        %575 = vmatpush1.bf16.msra.mxu0 %v542
        %576 = vmatprep.subr.bf16.mxu0 %v541
        %577 = vmatpush1.bf16.msra.mxu0 %v540
        %578 = vmatprep.subr.bf16.mxu0 0
        %579 = vmatpush2.bf16.msra.mxu0 0
        %580 = vmatprep.subr.bf16.mxu0 0
        %581 = vmatpush2.bf16.msra.mxu0 0
        %582 = vmatprep.subr.bf16.mxu0 0
        %583 = vmatpush2.bf16.msra.mxu0 0
        %584 = vmatprep.subr.bf16.mxu0 0
        %585 = vmatpush2.bf16.msra.mxu0 0
        %586 = vmatprep.subr.bf16.mxu0 0
        %587 = vmatpush2.bf16.msra.mxu0 0
        %588 = vmatprep.subr.bf16.mxu0 0
        %589 = vmatpush2.bf16.msra.mxu0 0
        %590 = vmatprep.subr.bf16.mxu0 0
        %591 = vmatpush2.bf16.msra.mxu0 0
        %592 = vmatprep.subr.bf16.mxu0 0
        %593 = vmatpush2.bf16.msra.mxu0 0
        %594 = vmatprep.mubr.bf16.mxu0 0
        %595 = vmatmul.mubr.bf16.gmra.mxu0 %v557
        %v596 = vpop.f32.mrf.mxu0
        %v597 = vadd.f32 %v509, %v596
        %v598 = vpop.f32.mrf.mxu0
        %v599 = vadd.f32 %v513, %v598
        %v600 = vpop.f32.mrf.mxu0
        %v601 = vadd.f32 %v509, %v600
        %v602 = vpop.f32.mrf.mxu0
        %603 = vmatprep.mubr.bf16.mxu0 0
        %604 = vmatmul.mubr.bf16.gmra.mxu0 %v560
        %v605 = vpop.f32.mrf.mxu0
        %v606 = vadd.f32 %v509, %v605
        %v607 = vpop.f32.mrf.mxu0
        %v608 = vpop.f32.mrf.mxu0
        %v609 = vpop.f32.mrf.mxu0
        %610 = vdwg.mxu0
        %v611 = vrot.slane %v597, 7
        %v612 = vmul.f32 %v611, %v388
        %v613 = vrot.slane %v597, 1
        %v614 = vmul.f32 %v613, %v391
        %v615 = vlaneseq
        %v616 = vshrl.u32 %v615, 7
        %v617 = vsub.s32 0, %v616
        %v618 = vrot.slane %v606, %v617
        %v619 = vmul.f32 %v612, %v599
        %v620 = vmul.f32 %v597, %v599
        %v621 = vmul.f32 %v614, %v599
        %v622 = vmul.f32 %v601, %v599
        %v623 = vmul.f32 %v618, %v599
        %v625 = vsel %vm460, %v619, 0
        %v628 = vsel %vm460, %v620, 0
        %v631 = vsel %vm460, %v621, 0
        %v634 = vsel %vm460, %v622, 0
        %v637 = vsel %vm460, %v623, 0
        %639 = vmatprep.subr.mxu0 0.0
        %640 = vmatpush1.msra.mxu0 0.0
        %641 = vmatprep.subr.mxu0 0.0
        %642 = vmatpush1.msra.mxu0 0.0
        %643 = vmatprep.subr.mxu0 0.0
        %644 = vmatpush1.msra.mxu0 0.0
        %645 = vmatprep.subr.mxu0 0.0
        %646 = vmatpush1.msra.mxu0 0.0
        %647 = vmatprep.subr.mxu0 0.0
        %648 = vmatpush1.msra.mxu0 0.0
        %649 = vmatprep.subr.mxu0 0.0
        %650 = vmatpush1.msra.mxu0 0.0
        %651 = vmatprep.subr.mxu0 0.0
        %652 = vmatpush1.msra.mxu0 0.0
        %653 = vmatprep.subr.mxu0 0.0
        %654 = vmatpush1.msra.mxu0 0.0
        %655 = vmatprep.subr.mxu0 0.0
        %656 = vmatpush1.msra.mxu0 %v376
        %657 = vmatprep.subr.mxu0 0.0
        %658 = vmatpush1.msra.mxu0 %v375
        %659 = vmatprep.subr.mxu0 0.0
        %660 = vmatpush1.msra.mxu0 %v374
        %661 = vmatprep.subr.mxu0 0.0
        %662 = vmatpush1.msra.mxu0 %v373
        %663 = vmatprep.subr.mxu0 0.0
        %664 = vmatpush1.msra.mxu0 %v372
        %665 = vmatprep.subr.mxu0 0.0
        %666 = vmatpush1.msra.mxu0 %v371
        %667 = vmatprep.subr.mxu0 0.0
        %668 = vmatpush1.msra.mxu0 %v370
        %669 = vmatprep.subr.mxu0 0.0
        %670 = vmatpush1.msra.mxu0 %v369
        %671 = vmatprep.subr.mxu0 0.0
        %672 = vmatpush2.msra.mxu0 0.0
        %673 = vmatprep.subr.mxu0 0.0
        %674 = vmatpush2.msra.mxu0 0.0
        %675 = vmatprep.subr.mxu0 0.0
        %676 = vmatpush2.msra.mxu0 0.0
        %677 = vmatprep.subr.mxu0 0.0
        %678 = vmatpush2.msra.mxu0 0.0
        %679 = vmatprep.subr.mxu0 0.0
        %680 = vmatpush2.msra.mxu0 0.0
        %681 = vmatprep.subr.mxu0 0.0
        %682 = vmatpush2.msra.mxu0 0.0
        %683 = vmatprep.subr.mxu0 0.0
        %684 = vmatpush2.msra.mxu0 0.0
        %685 = vmatprep.subr.mxu0 0.0
        %686 = vmatpush2.msra.mxu0 0.0
        %687 = vmatprep.subr.mxu0 0.0
        %688 = vmatpush2.msra.mxu0 0.0
        %689 = vmatprep.subr.mxu0 0.0
        %690 = vmatpush2.msra.mxu0 0.0
        %691 = vmatprep.subr.mxu0 0.0
        %692 = vmatpush2.msra.mxu0 0.0
        %693 = vmatprep.subr.mxu0 0.0
        %694 = vmatpush2.msra.mxu0 0.0
        %695 = vmatprep.subr.mxu0 0.0
        %696 = vmatpush2.msra.mxu0 0.0
        %697 = vmatprep.subr.mxu0 0.0
        %698 = vmatpush2.msra.mxu0 0.0
        %699 = vmatprep.subr.mxu0 0.0
        %700 = vmatpush2.msra.mxu0 0.0
        %701 = vmatprep.subr.mxu0 0.0
        %702 = vmatpush2.msra.mxu0 0.0
        %703 = vmatprep.mubr.f32.mxu0 0.0
        %704 = vmatmul.mubr.f32.gmra.mxu0 %v625
        %v705 = vpop.f32.mrf.mxu0
        %v706 = vadd.f32 0.0, %v705
        %v707 = vpop.f32.mrf.mxu0
        %708 = vmatprep.mubr.f32.mxu0 0.0
        %709 = vmatmul.mubr.f32.gmra.mxu0 %v628
        %v710 = vpop.f32.mrf.mxu0
        %v711 = vadd.f32 0.0, %v710
        %v712 = vpop.f32.mrf.mxu0
        %713 = vmatprep.mubr.f32.mxu0 0.0
        %714 = vmatmul.mubr.f32.gmra.mxu0 %v631
        %v715 = vpop.f32.mrf.mxu0
        %v716 = vadd.f32 0.0, %v715
        %v717 = vpop.f32.mrf.mxu0
        %718 = vmatprep.mubr.f32.mxu0 0.0
        %719 = vmatmul.mubr.f32.gmra.mxu0 %v634
        %v720 = vpop.f32.mrf.mxu0
        %v721 = vadd.f32 0.0, %v720
        %v722 = vpop.f32.mrf.mxu0
        %723 = vmatprep.mubr.f32.mxu0 0.0
        %724 = vmatmul.mubr.f32.gmra.mxu0 %v637
        %v725 = vpop.f32.mrf.mxu0
        %v726 = vadd.f32 0.0, %v725
        %v727 = vpop.f32.mrf.mxu0
        %728 = vdwg.mxu0
        %vm729 = vcmask 31744
        %v730 = vsel %vm729, %v706, -inf
        %v731 = vsel %vm729, %v711, -inf
        %v732 = vsel %vm729, %v716, -inf
        %v733 = vsel %vm729, %v721, -inf
        %v734 = vsel %vm729, %v726, -inf
        %v735 = vmax.f32 %v730, %v734
        %v736 = vmax.f32 %v735, %v731
        %v737 = vmax.f32 %v732, %v733
        %v738 = vmax.f32 %v736, %v737
        %v739 = vsub.f32 %v706, %v738
        %v740 = vsub.f32 %v711, %v738
        %v741 = vsub.f32 %v716, %v738
        %v742 = vsub.f32 %v721, %v738
        %v743 = vsub.f32 %v726, %v738
        %v744 = vmul.f32 %v739, 1.442695
        %v745 = vpow.pop %v744
        %v746 = vmul.f32 %v740, 1.442695
        %v747 = vpow.pop %v746
        %v748 = vmul.f32 %v741, 1.442695
        %v749 = vpow.pop %v748
        %v750 = vmul.f32 %v742, 1.442695
        %v751 = vpow.pop %v750
        %v752 = vmul.f32 %v743, 1.442695
        %v753 = vpow.pop %v752
        %v754 = vsel %vm729, %v745, 0.0
        %v755 = vsel %vm729, %v747, 0.0
        %v756 = vadd.f32 %v754, %v755
        %v757 = vsel %vm729, %v749, 0.0
        %v758 = vadd.f32 %v756, %v757
        %v759 = vsel %vm729, %v751, 0.0
        %v760 = vadd.f32 %v758, %v759
        %v761 = vsel %vm729, %v753, 0.0
        %v762 = vadd.f32 %v760, %v761
        %v763 = vrcp.pop %v762
        %v764 = vmul.f32 %v745, %v763
        %v765 = vmul.f32 %v747, %v763
        %v766 = vmul.f32 %v749, %v763
        %v767 = vmul.f32 %v751, %v763
        %v768 = vmul.f32 %v753, %v763
        %770 = vrot.lane.b32.xlu0 %v377, 124
        %v771 = vpop.permute.xlu0 %770
        %v773 = vsel %vm729, %v764, 0
        %v776 = vsel %vm729, %v765, 0
        %v779 = vsel %vm729, %v766, 0
        %v782 = vsel %vm729, %v767, 0
        %v785 = vsel %vm729, %v768, 0
        %vm787 = vcmask 1043456
        %v788 = vsel %vm787, %v771, 0
        %790 = vmatprep.subr.mxu0 0.0
        %791 = vmatpush1.msra.mxu0 0.0
        %792 = vmatprep.subr.mxu0 0.0
        %793 = vmatpush1.msra.mxu0 0.0
        %794 = vmatprep.subr.mxu0 0.0
        %795 = vmatpush1.msra.mxu0 0.0
        %796 = vmatprep.subr.mxu0 0.0
        %797 = vmatpush1.msra.mxu0 0.0
        %798 = vmatprep.subr.mxu0 0.0
        %799 = vmatpush1.msra.mxu0 0.0
        %800 = vmatprep.subr.mxu0 0.0
        %801 = vmatpush1.msra.mxu0 0.0
        %802 = vmatprep.subr.mxu0 0.0
        %803 = vmatpush1.msra.mxu0 0.0
        %804 = vmatprep.subr.mxu0 0.0
        %805 = vmatpush1.msra.mxu0 0.0
        %806 = vmatprep.subr.mxu0 0.0
        %807 = vmatpush1.msra.mxu0 0.0
        %808 = vmatprep.subr.mxu0 0.0
        %809 = vmatpush1.msra.mxu0 0.0
        %810 = vmatprep.subr.mxu0 0.0
        %811 = vmatpush1.msra.mxu0 0.0
        %812 = vmatprep.subr.mxu0 0.0
        %813 = vmatpush1.msra.mxu0 0.0
        %814 = vmatprep.subr.mxu0 0.0
        %815 = vmatpush1.msra.mxu0 0.0
        %816 = vmatprep.subr.mxu0 0.0
        %817 = vmatpush1.msra.mxu0 0.0
        %818 = vmatprep.subr.mxu0 0.0
        %819 = vmatpush1.msra.mxu0 0.0
        %820 = vmatprep.subr.mxu0 0.0
        %821 = vmatpush1.msra.mxu0 %v788
        %822 = vmatprep.subr.mxu0 0.0
        %823 = vmatpush2.msra.mxu0 0.0
        %824 = vmatprep.subr.mxu0 0.0
        %825 = vmatpush2.msra.mxu0 0.0
        %826 = vmatprep.subr.mxu0 0.0
        %827 = vmatpush2.msra.mxu0 0.0
        %828 = vmatprep.subr.mxu0 0.0
        %829 = vmatpush2.msra.mxu0 0.0
        %830 = vmatprep.subr.mxu0 0.0
        %831 = vmatpush2.msra.mxu0 0.0
        %832 = vmatprep.subr.mxu0 0.0
        %833 = vmatpush2.msra.mxu0 0.0
        %834 = vmatprep.subr.mxu0 0.0
        %835 = vmatpush2.msra.mxu0 0.0
        %836 = vmatprep.subr.mxu0 0.0
        %837 = vmatpush2.msra.mxu0 0.0
        %838 = vmatprep.subr.mxu0 0.0
        %839 = vmatpush2.msra.mxu0 0.0
        %840 = vmatprep.subr.mxu0 0.0
        %841 = vmatpush2.msra.mxu0 0.0
        %842 = vmatprep.subr.mxu0 0.0
        %843 = vmatpush2.msra.mxu0 0.0
        %844 = vmatprep.subr.mxu0 0.0
        %845 = vmatpush2.msra.mxu0 0.0
        %846 = vmatprep.subr.mxu0 0.0
        %847 = vmatpush2.msra.mxu0 0.0
        %848 = vmatprep.subr.mxu0 0.0
        %849 = vmatpush2.msra.mxu0 0.0
        %850 = vmatprep.subr.mxu0 0.0
        %851 = vmatpush2.msra.mxu0 0.0
        %852 = vmatprep.subr.mxu0 0.0
        %853 = vmatpush2.msra.mxu0 0.0
        %854 = vmatprep.mubr.f32.mxu0 0.0
        %855 = vmatmul.mubr.f32.gmra.mxu0 %v773
        %v856 = vpop.f32.mrf.mxu0
        %v857 = vadd.f32 0.0, %v856
        %v858 = vpop.f32.mrf.mxu0
        %859 = vmatprep.mubr.f32.mxu0 0.0
        %860 = vmatmul.mubr.f32.gmra.mxu0 %v776
        %v861 = vpop.f32.mrf.mxu0
        %v862 = vadd.f32 0.0, %v861
        %v863 = vpop.f32.mrf.mxu0
        %864 = vmatprep.mubr.f32.mxu0 0.0
        %865 = vmatmul.mubr.f32.gmra.mxu0 %v779
        %v866 = vpop.f32.mrf.mxu0
        %v867 = vadd.f32 0.0, %v866
        %v868 = vpop.f32.mrf.mxu0
        %869 = vmatprep.mubr.f32.mxu0 0.0
        %870 = vmatmul.mubr.f32.gmra.mxu0 %v782
        %v871 = vpop.f32.mrf.mxu0
        %v872 = vadd.f32 0.0, %v871
        %v873 = vpop.f32.mrf.mxu0
        %874 = vmatprep.mubr.f32.mxu0 0.0
        %875 = vmatmul.mubr.f32.gmra.mxu0 %v785
        %v876 = vpop.f32.mrf.mxu0
        %v877 = vadd.f32 0.0, %v876
        %v878 = vpop.f32.mrf.mxu0
        %879 = vdwg.mxu0
        %885 = vrot.lane.b32.xlu0 %v612, 64
        %v886 = vpop.permute.xlu0 %885
        %887 = vrot.lane.b32.xlu0 %v597, 64
        %v888 = vpop.permute.xlu0 %887
        %889 = vrot.lane.b32.xlu0 %v614, 64
        %v890 = vpop.permute.xlu0 %889
        %891 = vrot.lane.b32.xlu0 %v601, 64
        %v892 = vpop.permute.xlu0 %891
        %893 = vrot.lane.b32.xlu0 %v618, 64
        %v894 = vpop.permute.xlu0 %893
        %v900 = vmul.f32 %v857, %v886
        %v901 = vmul.f32 %v862, %v888
        %v902 = vmul.f32 %v867, %v890
        %v903 = vmul.f32 %v872, %v892
        %v904 = vmul.f32 %v877, %v894
        %v905 = vsel %vm460, %v900, 0.0
        %v906 = vsel %vm460, %v901, 0.0
        %v907 = vadd.f32 %v905, %v906
        %v908 = vsel %vm460, %v902, 0.0
        %v909 = vadd.f32 %v907, %v908
        %v910 = vsel %vm460, %v903, 0.0
        %v911 = vadd.f32 %v909, %v910
        %v912 = vsel %vm460, %v904, 0.0
        %v913 = vadd.f32 %v911, %v912
        %v914 = vld [vmem:[#allocation10 + $0x4] sm:$0xf]
        %v915 = vld [vmem:[#allocation10 + $0x14] sm:$0xf]
        %v916 = vld [vmem:[#allocation10 + $0x24] sm:$0xf]
        %v917 = vld [vmem:[#allocation10 + $0x34] sm:$0xf]
        %v918 = vld [vmem:[#allocation10 + $0x44] sm:$0xf]
        %v919 = vld [vmem:[#allocation10 + $0x54] sm:$0xf]
        %v920 = vld [vmem:[#allocation10 + $0x64] sm:$0xf]
        %v921 = vld [vmem:[#allocation10 + $0x74] sm:$0xf]
        %v922 = vpack.c.bf16 %v913, %v913
        %v923 = vld [vmem:[#allocation12 + $0x2] sm:$0x1]
        %v924 = vlaneseq
        %v925 = vshrl.u32 %v924, 7
        %v926 = vsub.s32 0, %v925
        %v927 = vrot.slane %v923, %v926
        %v936 = vunpack.c.l.b16 %v914
        %v937 = vunpack.c.l.b16 %v915
        %v938 = vunpack.c.l.b16 %v916
        %v939 = vunpack.c.l.b16 %v917
        %v940 = vunpack.c.l.b16 %v918
        %v941 = vunpack.c.l.b16 %v919
        %v942 = vunpack.c.l.b16 %v920
        %v943 = vunpack.c.l.b16 %v921
        %v944 = vpack.c.b16 %v937, %v936
        %v945 = vpack.c.b16 %v939, %v938
        %v946 = vpack.c.b16 %v941, %v940
        %v947 = vpack.c.b16 %v943, %v942
        %948 = vrot.lane.b32.xlu0 %v944, 64
        %v949 = vpop.permute.xlu0 %948
        %950 = vrot.lane.b32.xlu0 %v945, 64
        %v951 = vpop.permute.xlu0 %950
        %952 = vrot.lane.b32.xlu0 %v946, 64
        %v953 = vpop.permute.xlu0 %952
        %954 = vrot.lane.b32.xlu0 %v947, 64
        %v955 = vpop.permute.xlu0 %954
        %961 = vrot.lane.b32.xlu0 %v927, 64
        %v962 = vpop.permute.xlu0 %961
        %v965 = vsel %vm460, %v922, 0
        %967 = vmatprep.subr.bf16.mxu0 0
        %968 = vmatpush1.bf16.msra.mxu0 0
        %969 = vmatprep.subr.bf16.mxu0 0
        %970 = vmatpush1.bf16.msra.mxu0 0
        %971 = vmatprep.subr.bf16.mxu0 0
        %972 = vmatpush1.bf16.msra.mxu0 0
        %973 = vmatprep.subr.bf16.mxu0 0
        %974 = vmatpush1.bf16.msra.mxu0 0
        %975 = vmatprep.subr.bf16.mxu0 0
        %976 = vmatpush1.bf16.msra.mxu0 %v955
        %977 = vmatprep.subr.bf16.mxu0 0
        %978 = vmatpush1.bf16.msra.mxu0 %v953
        %979 = vmatprep.subr.bf16.mxu0 0
        %980 = vmatpush1.bf16.msra.mxu0 %v951
        %981 = vmatprep.subr.bf16.mxu0 0
        %982 = vmatpush1.bf16.msra.mxu0 %v949
        %983 = vmatprep.subr.bf16.mxu0 0
        %984 = vmatpush2.bf16.msra.mxu0 0
        %985 = vmatprep.subr.bf16.mxu0 0
        %986 = vmatpush2.bf16.msra.mxu0 0
        %987 = vmatprep.subr.bf16.mxu0 0
        %988 = vmatpush2.bf16.msra.mxu0 0
        %989 = vmatprep.subr.bf16.mxu0 0
        %990 = vmatpush2.bf16.msra.mxu0 0
        %991 = vmatprep.subr.bf16.mxu0 0
        %992 = vmatpush2.bf16.msra.mxu0 0
        %993 = vmatprep.subr.bf16.mxu0 0
        %994 = vmatpush2.bf16.msra.mxu0 0
        %995 = vmatprep.subr.bf16.mxu0 0
        %996 = vmatpush2.bf16.msra.mxu0 0
        %997 = vmatprep.subr.bf16.mxu0 0
        %998 = vmatpush2.bf16.msra.mxu0 0
        %999 = vmatprep.mubr.bf16.mxu0 0
        %1000 = vmatmul.mubr.bf16.gmra.mxu0 %v965
        %v1001 = vpop.f32.mrf.mxu0
        %v1002 = vadd.f32 %v962, %v1001
        %v1003 = vpop.f32.mrf.mxu0
        %v1004 = vpop.f32.mrf.mxu0
        %v1005 = vpop.f32.mrf.mxu0
        %1006 = vdwg.mxu0
        %vm1007 = vcmp.gt.f32.partialorder %v1002, 0.0
        %v1008 = vmul.f32 %v1002, 0.01
        %v1009 = vsel %vm1007, %v1002, %v1008
        %v1011 = vrot.slane %v1009, 7
        %vm1013 = vcmask 1040384
        %v1014 = vsel %vm1013, %v469, %v1011
        %v1015 = vld [vmem:[#allocation10 + $0x8] sm:$0xff]
        %v1016 = vld [vmem:[#allocation10 + $0x18] sm:$0xff]
        %v1017 = vld [vmem:[#allocation10 + $0x28] sm:$0xff]
        %v1018 = vld [vmem:[#allocation10 + $0x38] sm:$0xff]
        %v1019 = vld [vmem:[#allocation10 + $0x48] sm:$0xff]
        %v1020 = vld [vmem:[#allocation10 + $0x58] sm:$0xff]
        %v1021 = vld [vmem:[#allocation10 + $0x68] sm:$0xff]
        %v1022 = vld [vmem:[#allocation10 + $0x78] sm:$0xff]
        %v1023 = vpack.c.bf16 %v1011, %v1014
        %s1024 = scalar_lea.vmem [#allocation12], 4
        %v1025 = vld [vmem:[%s1024] ss:$2 sm:$0x3]
        %v1027 = vlaneseq
        %v1028 = vshrl.u32 %v1027, 7
        %v1029 = vsub.s32 0, %v1028
        %v1030 = vrot.slane %v1025, %v1029
        %v1031 = vlaneseq
        %v1032 = vshrl.u32 %v1031, 7
        %v1033 = vsub.s32 1, %v1032
        %v1034 = vrot.slane %v1025, %v1033
        %v1045 = vunpack.c.l.b16 %v1015
        %v1046 = vunpack.c.h.b16 %v1015
        %v1047 = vunpack.c.l.b16 %v1016
        %v1048 = vunpack.c.h.b16 %v1016
        %v1049 = vunpack.c.l.b16 %v1017
        %v1050 = vunpack.c.h.b16 %v1017
        %v1051 = vunpack.c.l.b16 %v1018
        %v1052 = vunpack.c.h.b16 %v1018
        %v1053 = vunpack.c.l.b16 %v1019
        %v1054 = vunpack.c.h.b16 %v1019
        %v1055 = vunpack.c.l.b16 %v1020
        %v1056 = vunpack.c.h.b16 %v1020
        %v1057 = vunpack.c.l.b16 %v1021
        %v1058 = vunpack.c.h.b16 %v1021
        %v1059 = vunpack.c.l.b16 %v1022
        %v1060 = vunpack.c.h.b16 %v1022
        %v1061 = vpack.c.b16 %v1047, %v1045
        %v1062 = vpack.c.b16 %v1048, %v1046
        %v1063 = vpack.c.b16 %v1051, %v1049
        %v1064 = vpack.c.b16 %v1052, %v1050
        %v1065 = vpack.c.b16 %v1055, %v1053
        %v1066 = vpack.c.b16 %v1056, %v1054
        %v1067 = vpack.c.b16 %v1059, %v1057
        %v1068 = vpack.c.b16 %v1060, %v1058
        %v1078 = vsel %vm460, %v1023, 0
        %1080 = vmatprep.subr.bf16.mxu0 0
        %1081 = vmatpush1.bf16.msra.mxu0 0
        %1082 = vmatprep.subr.bf16.mxu0 0
        %1083 = vmatpush1.bf16.msra.mxu0 0
        %1084 = vmatprep.subr.bf16.mxu0 0
        %1085 = vmatpush1.bf16.msra.mxu0 0
        %1086 = vmatprep.subr.bf16.mxu0 0
        %1087 = vmatpush1.bf16.msra.mxu0 0
        %1088 = vmatprep.subr.bf16.mxu0 %v1068
        %1089 = vmatpush1.bf16.msra.mxu0 %v1067
        %1090 = vmatprep.subr.bf16.mxu0 %v1066
        %1091 = vmatpush1.bf16.msra.mxu0 %v1065
        %1092 = vmatprep.subr.bf16.mxu0 %v1064
        %1093 = vmatpush1.bf16.msra.mxu0 %v1063
        %1094 = vmatprep.subr.bf16.mxu0 %v1062
        %1095 = vmatpush1.bf16.msra.mxu0 %v1061
        %1096 = vmatprep.subr.bf16.mxu0 0
        %1097 = vmatpush2.bf16.msra.mxu0 0
        %1098 = vmatprep.subr.bf16.mxu0 0
        %1099 = vmatpush2.bf16.msra.mxu0 0
        %1100 = vmatprep.subr.bf16.mxu0 0
        %1101 = vmatpush2.bf16.msra.mxu0 0
        %1102 = vmatprep.subr.bf16.mxu0 0
        %1103 = vmatpush2.bf16.msra.mxu0 0
        %1104 = vmatprep.subr.bf16.mxu0 0
        %1105 = vmatpush2.bf16.msra.mxu0 0
        %1106 = vmatprep.subr.bf16.mxu0 0
        %1107 = vmatpush2.bf16.msra.mxu0 0
        %1108 = vmatprep.subr.bf16.mxu0 0
        %1109 = vmatpush2.bf16.msra.mxu0 0
        %1110 = vmatprep.subr.bf16.mxu0 0
        %1111 = vmatpush2.bf16.msra.mxu0 0
        %1112 = vmatprep.mubr.bf16.mxu0 0
        %1113 = vmatmul.mubr.bf16.gmra.mxu0 %v1078
        %v1114 = vpop.f32.mrf.mxu0
        %v1115 = vadd.f32 %v1030, %v1114
        %v1116 = vpop.f32.mrf.mxu0
        %v1117 = vadd.f32 %v1034, %v1116
        %v1118 = vpop.f32.mrf.mxu0
        %v1119 = vadd.f32 %v1030, %v1118
        %v1120 = vpop.f32.mrf.mxu0
        %1121 = vdwg.mxu0
        %v1122 = vlaneseq
        %v1123 = vshrl.u32 %v1122, 7
        %v1124 = vsub.s32 0, %v1123
        %v1125 = vrot.slane %v1117, %v1124
        %v1126 = vmul.f32 %v1117, %v1115
        %v1128 = vsel %vm460, %v1126, 0
        %1130 = vmatprep.subr.mxu0 0.0
        %1131 = vmatpush1.msra.mxu0 0.0
        %1132 = vmatprep.subr.mxu0 0.0
        %1133 = vmatpush1.msra.mxu0 0.0
        %1134 = vmatprep.subr.mxu0 0.0
        %1135 = vmatpush1.msra.mxu0 0.0
        %1136 = vmatprep.subr.mxu0 0.0
        %1137 = vmatpush1.msra.mxu0 0.0
        %1138 = vmatprep.subr.mxu0 0.0
        %1139 = vmatpush1.msra.mxu0 0.0
        %1140 = vmatprep.subr.mxu0 0.0
        %1141 = vmatpush1.msra.mxu0 0.0
        %1142 = vmatprep.subr.mxu0 0.0
        %1143 = vmatpush1.msra.mxu0 0.0
        %1144 = vmatprep.subr.mxu0 0.0
        %1145 = vmatpush1.msra.mxu0 0.0
        %1146 = vmatprep.subr.mxu0 0.0
        %1147 = vmatpush1.msra.mxu0 %v376
        %1148 = vmatprep.subr.mxu0 0.0
        %1149 = vmatpush1.msra.mxu0 %v375
        %1150 = vmatprep.subr.mxu0 0.0
        %1151 = vmatpush1.msra.mxu0 %v374
        %1152 = vmatprep.subr.mxu0 0.0
        %1153 = vmatpush1.msra.mxu0 %v373
        %1154 = vmatprep.subr.mxu0 0.0
        %1155 = vmatpush1.msra.mxu0 %v372
        %1156 = vmatprep.subr.mxu0 0.0
        %1157 = vmatpush1.msra.mxu0 %v371
        %1158 = vmatprep.subr.mxu0 0.0
        %1159 = vmatpush1.msra.mxu0 %v370
        %1160 = vmatprep.subr.mxu0 0.0
        %1161 = vmatpush1.msra.mxu0 %v369
        %1162 = vmatprep.subr.mxu0 0.0
        %1163 = vmatpush2.msra.mxu0 0.0
        %1164 = vmatprep.subr.mxu0 0.0
        %1165 = vmatpush2.msra.mxu0 0.0
        %1166 = vmatprep.subr.mxu0 0.0
        %1167 = vmatpush2.msra.mxu0 0.0
        %1168 = vmatprep.subr.mxu0 0.0
        %1169 = vmatpush2.msra.mxu0 0.0
        %1170 = vmatprep.subr.mxu0 0.0
        %1171 = vmatpush2.msra.mxu0 0.0
        %1172 = vmatprep.subr.mxu0 0.0
        %1173 = vmatpush2.msra.mxu0 0.0
        %1174 = vmatprep.subr.mxu0 0.0
        %1175 = vmatpush2.msra.mxu0 0.0
        %1176 = vmatprep.subr.mxu0 0.0
        %1177 = vmatpush2.msra.mxu0 0.0
        %1178 = vmatprep.subr.mxu0 0.0
        %1179 = vmatpush2.msra.mxu0 0.0
        %1180 = vmatprep.subr.mxu0 0.0
        %1181 = vmatpush2.msra.mxu0 0.0
        %1182 = vmatprep.subr.mxu0 0.0
        %1183 = vmatpush2.msra.mxu0 0.0
        %1184 = vmatprep.subr.mxu0 0.0
        %1185 = vmatpush2.msra.mxu0 0.0
        %1186 = vmatprep.subr.mxu0 0.0
        %1187 = vmatpush2.msra.mxu0 0.0
        %1188 = vmatprep.subr.mxu0 0.0
        %1189 = vmatpush2.msra.mxu0 0.0
        %1190 = vmatprep.subr.mxu0 0.0
        %1191 = vmatpush2.msra.mxu0 0.0
        %1192 = vmatprep.subr.mxu0 0.0
        %1193 = vmatpush2.msra.mxu0 0.0
        %1194 = vmatprep.mubr.f32.mxu0 0.0
        %1195 = vmatmul.mubr.f32.gmra.mxu0 %v1128
        %v1196 = vpop.f32.mrf.mxu0
        %v1197 = vadd.f32 0.0, %v1196
        %v1198 = vpop.f32.mrf.mxu0
        %1199 = vdwg.mxu0
        %v1200 = vmul.f32 %v1125, %v1115
        %v1201 = vmul.f32 %v1125, %v1119
        %vm1204 = vcmask 1046528
        %v1205 = vrot.slane %v1200, 1
        %v1206 = vrot.slane %v1201, 1
        %v1207 = vsel %vm1204, %v1205, %v1206
        %v1208 = vsel %vm460, %v1207, 0
        %1210 = vmatprep.subr.mxu0 0.0
        %1211 = vmatpush1.msra.mxu0 0.0
        %1212 = vmatprep.subr.mxu0 0.0
        %1213 = vmatpush1.msra.mxu0 0.0
        %1214 = vmatprep.subr.mxu0 0.0
        %1215 = vmatpush1.msra.mxu0 0.0
        %1216 = vmatprep.subr.mxu0 0.0
        %1217 = vmatpush1.msra.mxu0 0.0
        %1218 = vmatprep.subr.mxu0 0.0
        %1219 = vmatpush1.msra.mxu0 0.0
        %1220 = vmatprep.subr.mxu0 0.0
        %1221 = vmatpush1.msra.mxu0 0.0
        %1222 = vmatprep.subr.mxu0 0.0
        %1223 = vmatpush1.msra.mxu0 0.0
        %1224 = vmatprep.subr.mxu0 0.0
        %1225 = vmatpush1.msra.mxu0 0.0
        %1226 = vmatprep.subr.mxu0 0.0
        %1227 = vmatpush1.msra.mxu0 %v376
        %1228 = vmatprep.subr.mxu0 0.0
        %1229 = vmatpush1.msra.mxu0 %v375
        %1230 = vmatprep.subr.mxu0 0.0
        %1231 = vmatpush1.msra.mxu0 %v374
        %1232 = vmatprep.subr.mxu0 0.0
        %1233 = vmatpush1.msra.mxu0 %v373
        %1234 = vmatprep.subr.mxu0 0.0
        %1235 = vmatpush1.msra.mxu0 %v372
        %1236 = vmatprep.subr.mxu0 0.0
        %1237 = vmatpush1.msra.mxu0 %v371
        %1238 = vmatprep.subr.mxu0 0.0
        %1239 = vmatpush1.msra.mxu0 %v370
        %1240 = vmatprep.subr.mxu0 0.0
        %1241 = vmatpush1.msra.mxu0 %v369
        %1242 = vmatprep.subr.mxu0 0.0
        %1243 = vmatpush2.msra.mxu0 0.0
        %1244 = vmatprep.subr.mxu0 0.0
        %1245 = vmatpush2.msra.mxu0 0.0
        %1246 = vmatprep.subr.mxu0 0.0
        %1247 = vmatpush2.msra.mxu0 0.0
        %1248 = vmatprep.subr.mxu0 0.0
        %1249 = vmatpush2.msra.mxu0 0.0
        %1250 = vmatprep.subr.mxu0 0.0
        %1251 = vmatpush2.msra.mxu0 0.0
        %1252 = vmatprep.subr.mxu0 0.0
        %1253 = vmatpush2.msra.mxu0 0.0
        %1254 = vmatprep.subr.mxu0 0.0
        %1255 = vmatpush2.msra.mxu0 0.0
        %1256 = vmatprep.subr.mxu0 0.0
        %1257 = vmatpush2.msra.mxu0 0.0
        %1258 = vmatprep.subr.mxu0 0.0
        %1259 = vmatpush2.msra.mxu0 0.0
        %1260 = vmatprep.subr.mxu0 0.0
        %1261 = vmatpush2.msra.mxu0 0.0
        %1262 = vmatprep.subr.mxu0 0.0
        %1263 = vmatpush2.msra.mxu0 0.0
        %1264 = vmatprep.subr.mxu0 0.0
        %1265 = vmatpush2.msra.mxu0 0.0
        %1266 = vmatprep.subr.mxu0 0.0
        %1267 = vmatpush2.msra.mxu0 0.0
        %1268 = vmatprep.subr.mxu0 0.0
        %1269 = vmatpush2.msra.mxu0 0.0
        %1270 = vmatprep.subr.mxu0 0.0
        %1271 = vmatpush2.msra.mxu0 0.0
        %1272 = vmatprep.subr.mxu0 0.0
        %1273 = vmatpush2.msra.mxu0 0.0
        %1274 = vmatprep.mubr.f32.mxu0 0.0
        %1275 = vmatmul.mubr.f32.gmra.mxu0 %v1208
        %v1276 = vpop.f32.mrf.mxu0
        %v1277 = vadd.f32 0.0, %v1276
        %v1278 = vpop.f32.mrf.mxu0
        %1279 = vdwg.mxu0
        %vm1280 = vcmp.gt.f32.partialorder %v385, 0.5
        %v1281 = vsel %vm1280, 1, 0
        %vm1282 = vcmp.eq.s32.totalorder %v1281, 1
        %v1283 = vsel %vm1282, -1e+30, %v1277
        %v1284 = vsel %vm729, %v1283, -inf
        %v1285 = vrot.slane %v1284, 4
        %v1286 = vmax.f32 %v1284, %v1285
        %v1287 = vrot.slane %v1286, 2
        %v1288 = vmax.f32 %v1286, %v1287
        %v1289 = vrot.slane %v1288, 1
        %v1290 = vmax.f32 %v1288, %v1289
        %v1291 = vmax.f32 %v1197, %v1290
        %v1292 = vsub.f32 %v1197, %v1291
        %v1293 = vmul.f32 %v1292, 1.442695
        %v1294 = vpow.pop %v1293
        %v1295 = vlaneseq
        %v1296 = vshrl.u32 %v1295, 7
        %v1297 = vsub.s32 0, %v1296
        %v1298 = vrot.slane %v1291, %v1297
        %v1299 = vsub.f32 %v1283, %v1298
        %v1300 = vmul.f32 %v1299, 1.442695
        %v1301 = vpow.pop %v1300
        %v1302 = vsel %vm729, %v1301, 0.0
        %v1303 = vrot.slane %v1302, 4
        %v1304 = vadd.f32 %v1302, %v1303
        %v1305 = vrot.slane %v1304, 2
        %v1306 = vadd.f32 %v1304, %v1305
        %v1307 = vrot.slane %v1306, 1
        %v1308 = vadd.f32 %v1306, %v1307
        %v1309 = vadd.f32 %v1294, %v1308
        %v1310 = vrcp.pop %v1309
        %v1311 = vmul.f32 %v1294, %v1310
        %v1312 = vlaneseq
        %v1313 = vshrl.u32 %v1312, 7
        %v1314 = vsub.s32 0, %v1313
        %v1315 = vrot.slane %v1310, %v1314
        %v1316 = vmul.f32 %v1301, %v1315
        %v1318 = vsel %vm729, %v1311, 0
        %1320 = vmatprep.subr.mxu0 0.0
        %1321 = vmatpush1.msra.mxu0 0.0
        %1322 = vmatprep.subr.mxu0 0.0
        %1323 = vmatpush1.msra.mxu0 0.0
        %1324 = vmatprep.subr.mxu0 0.0
        %1325 = vmatpush1.msra.mxu0 0.0
        %1326 = vmatprep.subr.mxu0 0.0
        %1327 = vmatpush1.msra.mxu0 0.0
        %1328 = vmatprep.subr.mxu0 0.0
        %1329 = vmatpush1.msra.mxu0 0.0
        %1330 = vmatprep.subr.mxu0 0.0
        %1331 = vmatpush1.msra.mxu0 0.0
        %1332 = vmatprep.subr.mxu0 0.0
        %1333 = vmatpush1.msra.mxu0 0.0
        %1334 = vmatprep.subr.mxu0 0.0
        %1335 = vmatpush1.msra.mxu0 0.0
        %1336 = vmatprep.subr.mxu0 0.0
        %1337 = vmatpush1.msra.mxu0 0.0
        %1338 = vmatprep.subr.mxu0 0.0
        %1339 = vmatpush1.msra.mxu0 0.0
        %1340 = vmatprep.subr.mxu0 0.0
        %1341 = vmatpush1.msra.mxu0 0.0
        %1342 = vmatprep.subr.mxu0 0.0
        %1343 = vmatpush1.msra.mxu0 0.0
        %1344 = vmatprep.subr.mxu0 0.0
        %1345 = vmatpush1.msra.mxu0 0.0
        %1346 = vmatprep.subr.mxu0 0.0
        %1347 = vmatpush1.msra.mxu0 0.0
        %1348 = vmatprep.subr.mxu0 0.0
        %1349 = vmatpush1.msra.mxu0 0.0
        %1350 = vmatprep.subr.mxu0 0.0
        %1351 = vmatpush1.msra.mxu0 %v788
        %1352 = vmatprep.subr.mxu0 0.0
        %1353 = vmatpush2.msra.mxu0 0.0
        %1354 = vmatprep.subr.mxu0 0.0
        %1355 = vmatpush2.msra.mxu0 0.0
        %1356 = vmatprep.subr.mxu0 0.0
        %1357 = vmatpush2.msra.mxu0 0.0
        %1358 = vmatprep.subr.mxu0 0.0
        %1359 = vmatpush2.msra.mxu0 0.0
        %1360 = vmatprep.subr.mxu0 0.0
        %1361 = vmatpush2.msra.mxu0 0.0
        %1362 = vmatprep.subr.mxu0 0.0
        %1363 = vmatpush2.msra.mxu0 0.0
        %1364 = vmatprep.subr.mxu0 0.0
        %1365 = vmatpush2.msra.mxu0 0.0
        %1366 = vmatprep.subr.mxu0 0.0
        %1367 = vmatpush2.msra.mxu0 0.0
        %1368 = vmatprep.subr.mxu0 0.0
        %1369 = vmatpush2.msra.mxu0 0.0
        %1370 = vmatprep.subr.mxu0 0.0
        %1371 = vmatpush2.msra.mxu0 0.0
        %1372 = vmatprep.subr.mxu0 0.0
        %1373 = vmatpush2.msra.mxu0 0.0
        %1374 = vmatprep.subr.mxu0 0.0
        %1375 = vmatpush2.msra.mxu0 0.0
        %1376 = vmatprep.subr.mxu0 0.0
        %1377 = vmatpush2.msra.mxu0 0.0
        %1378 = vmatprep.subr.mxu0 0.0
        %1379 = vmatpush2.msra.mxu0 0.0
        %1380 = vmatprep.subr.mxu0 0.0
        %1381 = vmatpush2.msra.mxu0 0.0
        %1382 = vmatprep.subr.mxu0 0.0
        %1383 = vmatpush2.msra.mxu0 0.0
        %1384 = vmatprep.mubr.f32.mxu0 0.0
        %1385 = vmatmul.mubr.f32.gmra.mxu0 %v1318
        %v1386 = vpop.f32.mrf.mxu0
        %v1387 = vadd.f32 0.0, %v1386
        %v1388 = vpop.f32.mrf.mxu0
        %1389 = vdwg.mxu0
        %1391 = vrot.lane.b32.xlu0 %v1115, 64
        %v1392 = vpop.permute.xlu0 %1391
        %v1394 = vmul.f32 %v1387, %v1392
        %v1396 = vsel %vm729, %v1316, 0
        %1398 = vmatprep.subr.mxu0 0.0
        %1399 = vmatpush1.msra.mxu0 0.0
        %1400 = vmatprep.subr.mxu0 0.0
        %1401 = vmatpush1.msra.mxu0 0.0
        %1402 = vmatprep.subr.mxu0 0.0
        %1403 = vmatpush1.msra.mxu0 0.0
        %1404 = vmatprep.subr.mxu0 0.0
        %1405 = vmatpush1.msra.mxu0 0.0
        %1406 = vmatprep.subr.mxu0 0.0
        %1407 = vmatpush1.msra.mxu0 0.0
        %1408 = vmatprep.subr.mxu0 0.0
        %1409 = vmatpush1.msra.mxu0 0.0
        %1410 = vmatprep.subr.mxu0 0.0
        %1411 = vmatpush1.msra.mxu0 0.0
        %1412 = vmatprep.subr.mxu0 0.0
        %1413 = vmatpush1.msra.mxu0 0.0
        %1414 = vmatprep.subr.mxu0 0.0
        %1415 = vmatpush1.msra.mxu0 0.0
        %1416 = vmatprep.subr.mxu0 0.0
        %1417 = vmatpush1.msra.mxu0 0.0
        %1418 = vmatprep.subr.mxu0 0.0
        %1419 = vmatpush1.msra.mxu0 0.0
        %1420 = vmatprep.subr.mxu0 0.0
        %1421 = vmatpush1.msra.mxu0 0.0
        %1422 = vmatprep.subr.mxu0 0.0
        %1423 = vmatpush1.msra.mxu0 0.0
        %1424 = vmatprep.subr.mxu0 0.0
        %1425 = vmatpush1.msra.mxu0 0.0
        %1426 = vmatprep.subr.mxu0 0.0
        %1427 = vmatpush1.msra.mxu0 0.0
        %1428 = vmatprep.subr.mxu0 0.0
        %1429 = vmatpush1.msra.mxu0 %v788
        %1430 = vmatprep.subr.mxu0 0.0
        %1431 = vmatpush2.msra.mxu0 0.0
        %1432 = vmatprep.subr.mxu0 0.0
        %1433 = vmatpush2.msra.mxu0 0.0
        %1434 = vmatprep.subr.mxu0 0.0
        %1435 = vmatpush2.msra.mxu0 0.0
        %1436 = vmatprep.subr.mxu0 0.0
        %1437 = vmatpush2.msra.mxu0 0.0
        %1438 = vmatprep.subr.mxu0 0.0
        %1439 = vmatpush2.msra.mxu0 0.0
        %1440 = vmatprep.subr.mxu0 0.0
        %1441 = vmatpush2.msra.mxu0 0.0
        %1442 = vmatprep.subr.mxu0 0.0
        %1443 = vmatpush2.msra.mxu0 0.0
        %1444 = vmatprep.subr.mxu0 0.0
        %1445 = vmatpush2.msra.mxu0 0.0
        %1446 = vmatprep.subr.mxu0 0.0
        %1447 = vmatpush2.msra.mxu0 0.0
        %1448 = vmatprep.subr.mxu0 0.0
        %1449 = vmatpush2.msra.mxu0 0.0
        %1450 = vmatprep.subr.mxu0 0.0
        %1451 = vmatpush2.msra.mxu0 0.0
        %1452 = vmatprep.subr.mxu0 0.0
        %1453 = vmatpush2.msra.mxu0 0.0
        %1454 = vmatprep.subr.mxu0 0.0
        %1455 = vmatpush2.msra.mxu0 0.0
        %1456 = vmatprep.subr.mxu0 0.0
        %1457 = vmatpush2.msra.mxu0 0.0
        %1458 = vmatprep.subr.mxu0 0.0
        %1459 = vmatpush2.msra.mxu0 0.0
        %1460 = vmatprep.subr.mxu0 0.0
        %1461 = vmatpush2.msra.mxu0 0.0
        %1462 = vmatprep.mubr.f32.mxu0 0.0
        %1463 = vmatmul.mubr.f32.gmra.mxu0 %v1396
        %v1464 = vpop.f32.mrf.mxu0
        %v1465 = vadd.f32 0.0, %v1464
        %v1466 = vpop.f32.mrf.mxu0
        %1467 = vdwg.mxu0
        %v1469 = vrot.slane %v1115, 1
        %v1470 = vrot.slane %v1119, 1
        %v1471 = vsel %vm1204, %v1469, %v1470
        %1472 = vrot.lane.b32.xlu0 %v1471, 64
        %v1473 = vpop.permute.xlu0 %1472
        %v1475 = vmul.f32 %v1465, %v1473
        %v1476 = vsel %vm460, %v1475, 0.0
        %v1477 = vrot.slane %v1476, 4
        %v1478 = vadd.f32 %v1476, %v1477
        %v1479 = vrot.slane %v1478, 2
        %v1480 = vadd.f32 %v1478, %v1479
        %v1481 = vrot.slane %v1480, 1
        %v1482 = vadd.f32 %v1480, %v1481
        %v1483 = vadd.f32 %v1394, %v1482
        %v1484 = vld [vmem:[#allocation10 + $0xc] sm:$0xf]
        %v1485 = vld [vmem:[#allocation10 + $0x1c] sm:$0xf]
        %v1486 = vld [vmem:[#allocation10 + $0x2c] sm:$0xf]
        %v1487 = vld [vmem:[#allocation10 + $0x3c] sm:$0xf]
        %v1488 = vld [vmem:[#allocation10 + $0x4c] sm:$0xf]
        %v1489 = vld [vmem:[#allocation10 + $0x5c] sm:$0xf]
        %v1490 = vld [vmem:[#allocation10 + $0x6c] sm:$0xf]
        %v1491 = vld [vmem:[#allocation10 + $0x7c] sm:$0xf]
        %v1492 = vpack.c.bf16 %v1483, %v1483
        %v1493 = vld [vmem:[#allocation12 + $0x6] sm:$0x1]
        %v1502 = vunpack.c.l.b16 %v1484
        %v1503 = vunpack.c.l.b16 %v1485
        %v1504 = vunpack.c.l.b16 %v1486
        %v1505 = vunpack.c.l.b16 %v1487
        %v1506 = vunpack.c.l.b16 %v1488
        %v1507 = vunpack.c.l.b16 %v1489
        %v1508 = vunpack.c.l.b16 %v1490
        %v1509 = vunpack.c.l.b16 %v1491
        %v1510 = vpack.c.b16 %v1503, %v1502
        %v1511 = vpack.c.b16 %v1505, %v1504
        %v1512 = vpack.c.b16 %v1507, %v1506
        %v1513 = vpack.c.b16 %v1509, %v1508
        %1514 = vrot.lane.b32.xlu0 %v1510, 64
        %v1515 = vpop.permute.xlu0 %1514
        %1516 = vrot.lane.b32.xlu0 %v1511, 64
        %v1517 = vpop.permute.xlu0 %1516
        %1518 = vrot.lane.b32.xlu0 %v1512, 64
        %v1519 = vpop.permute.xlu0 %1518
        %1520 = vrot.lane.b32.xlu0 %v1513, 64
        %v1521 = vpop.permute.xlu0 %1520
        %v1527 = vlaneseq
        %v1528 = vshrl.u32 %v1527, 7
        %v1529 = vsub.s32 0, %v1528
        %v1530 = vrot.slane %v1493, %v1529
        %1531 = vrot.lane.b32.xlu0 %v1530, 64
        %v1532 = vpop.permute.xlu0 %1531
        %v1535 = vsel %vm460, %v1492, 0
        %1537 = vmatprep.subr.bf16.mxu0 0
        %1538 = vmatpush1.bf16.msra.mxu0 0
        %1539 = vmatprep.subr.bf16.mxu0 0
        %1540 = vmatpush1.bf16.msra.mxu0 0
        %1541 = vmatprep.subr.bf16.mxu0 0
        %1542 = vmatpush1.bf16.msra.mxu0 0
        %1543 = vmatprep.subr.bf16.mxu0 0
        %1544 = vmatpush1.bf16.msra.mxu0 0
        %1545 = vmatprep.subr.bf16.mxu0 0
        %1546 = vmatpush1.bf16.msra.mxu0 %v1521
        %1547 = vmatprep.subr.bf16.mxu0 0
        %1548 = vmatpush1.bf16.msra.mxu0 %v1519
        %1549 = vmatprep.subr.bf16.mxu0 0
        %1550 = vmatpush1.bf16.msra.mxu0 %v1517
        %1551 = vmatprep.subr.bf16.mxu0 0
        %1552 = vmatpush1.bf16.msra.mxu0 %v1515
        %1553 = vmatprep.subr.bf16.mxu0 0
        %1554 = vmatpush2.bf16.msra.mxu0 0
        %1555 = vmatprep.subr.bf16.mxu0 0
        %1556 = vmatpush2.bf16.msra.mxu0 0
        %1557 = vmatprep.subr.bf16.mxu0 0
        %1558 = vmatpush2.bf16.msra.mxu0 0
        %1559 = vmatprep.subr.bf16.mxu0 0
        %1560 = vmatpush2.bf16.msra.mxu0 0
        %1561 = vmatprep.subr.bf16.mxu0 0
        %1562 = vmatpush2.bf16.msra.mxu0 0
        %1563 = vmatprep.subr.bf16.mxu0 0
        %1564 = vmatpush2.bf16.msra.mxu0 0
        %1565 = vmatprep.subr.bf16.mxu0 0
        %1566 = vmatpush2.bf16.msra.mxu0 0
        %1567 = vmatprep.subr.bf16.mxu0 0
        %1568 = vmatpush2.bf16.msra.mxu0 0
        %1569 = vmatprep.mubr.bf16.mxu0 0
        %1570 = vmatmul.mubr.bf16.gmra.mxu0 %v1535
        %v1571 = vpop.f32.mrf.mxu0
        %v1572 = vadd.f32 %v1532, %v1571
        %v1573 = vpop.f32.mrf.mxu0
        %v1574 = vpop.f32.mrf.mxu0
        %v1575 = vpop.f32.mrf.mxu0
        %1576 = vdwg.mxu0
        %vm1577 = vcmp.gt.f32.partialorder %v1572, 0.0
        %v1578 = vmul.f32 %v1572, 0.01
        %v1579 = vsel %vm1577, %v1572, %v1578
        %v1580 = vmul.f32 %v1009, %v384
        %v1581 = vld [vmem:[#allocation12 + $0x9] sm:$0x1]
        %v1582 = vsel %vm460, %v1580, 0.0
        %1583 = vadd.xlane.f32.xlu0 %v1582
        %v1584 = vpop.xlane.xlu0 %1583
        %v1585 = vmul.f32 %v1584, %v473
        %v1586 = vsub.f32 %v1580, %v1585
        %v1587 = vmul.f32 %v1586, %v1586
        %v1588 = vsel %vm460, %v1587, 0.0
        %1589 = vadd.xlane.f32.xlu0 %v1588
        %v1590 = vpop.xlane.xlu0 %1589
        %v1591 = vmul.f32 %v1590, %v473
        %v1592 = vadd.f32 %v1591, 1e-06
        %v1593 = vrsqrt.pop %v1592
        %v1594 = vmul.f32 %v1586, %v1593
        %v1595 = vlaneseq
        %v1596 = vshrl.u32 %v1595, 7
        %v1597 = vsub.s32 0, %v1596
        %v1598 = vrot.slane %v1581, %v1597
        %v1599 = vmul.f32 %v1594, %v1598
        %1601 = vrot.lane.b32.xlu0 %v1598, 64
        %v1602 = vpop.permute.xlu0 %1601
        %v1604 = vadd.f32 %v1599, %v1602
        %s1605 = scalar_lea.vmem [#allocation10], 128
        %v1606 = vld [vmem:[%s1605] sm:$0xff]
        %v1607 = vld [vmem:[%s1605 + $0x10] sm:$0xff]
        %v1608 = vld [vmem:[%s1605 + $0x20] sm:$0xff]
        %v1609 = vld [vmem:[%s1605 + $0x30] sm:$0xff]
        %v1610 = vld [vmem:[%s1605 + $0x40] sm:$0xff]
        %v1611 = vld [vmem:[%s1605 + $0x50] sm:$0xff]
        %v1612 = vld [vmem:[%s1605 + $0x60] sm:$0xff]
        %v1613 = vld [vmem:[%s1605 + $0x70] sm:$0xff]
        %v1614 = vpack.c.bf16 %v459, %v1604
        %v1615 = vpack.c.bf16 %v1579, %v1579
        %s1616 = scalar_lea.vmem [#allocation12], 1
        %v1617 = vld [vmem:[%s1616] ss:$2 sm:$0x3]
        %v1619 = vlaneseq
        %v1620 = vshrl.u32 %v1619, 7
        %v1621 = vsub.s32 0, %v1620
        %v1622 = vrot.slane %v1617, %v1621
        %v1623 = vlaneseq
        %v1624 = vshrl.u32 %v1623, 7
        %v1625 = vsub.s32 1, %v1624
        %v1626 = vrot.slane %v1617, %v1625
        %v1637 = vunpack.c.l.b16 %v1606
        %v1638 = vunpack.c.h.b16 %v1606
        %v1639 = vunpack.c.l.b16 %v1607
        %v1640 = vunpack.c.h.b16 %v1607
        %v1641 = vunpack.c.l.b16 %v1608
        %v1642 = vunpack.c.h.b16 %v1608
        %v1643 = vunpack.c.l.b16 %v1609
        %v1644 = vunpack.c.h.b16 %v1609
        %v1645 = vunpack.c.l.b16 %v1610
        %v1646 = vunpack.c.h.b16 %v1610
        %v1647 = vunpack.c.l.b16 %v1611
        %v1648 = vunpack.c.h.b16 %v1611
        %v1649 = vunpack.c.l.b16 %v1612
        %v1650 = vunpack.c.h.b16 %v1612
        %v1651 = vunpack.c.l.b16 %v1613
        %v1652 = vunpack.c.h.b16 %v1613
        %v1653 = vpack.c.b16 %v1639, %v1637
        %v1654 = vpack.c.b16 %v1640, %v1638
        %v1655 = vpack.c.b16 %v1643, %v1641
        %v1656 = vpack.c.b16 %v1644, %v1642
        %v1657 = vpack.c.b16 %v1647, %v1645
        %v1658 = vpack.c.b16 %v1648, %v1646
        %v1659 = vpack.c.b16 %v1651, %v1649
        %v1660 = vpack.c.b16 %v1652, %v1650
        %v1670 = vsel %vm460, %v1614, 0
        %v1673 = vsel %vm460, %v1615, 0
        %1675 = vmatprep.subr.bf16.mxu0 0
        %1676 = vmatpush1.bf16.msra.mxu0 0
        %1677 = vmatprep.subr.bf16.mxu0 0
        %1678 = vmatpush1.bf16.msra.mxu0 0
        %1679 = vmatprep.subr.bf16.mxu0 0
        %1680 = vmatpush1.bf16.msra.mxu0 0
        %1681 = vmatprep.subr.bf16.mxu0 0
        %1682 = vmatpush1.bf16.msra.mxu0 0
        %1683 = vmatprep.subr.bf16.mxu0 %v1660
        %1684 = vmatpush1.bf16.msra.mxu0 %v1659
        %1685 = vmatprep.subr.bf16.mxu0 %v1658
        %1686 = vmatpush1.bf16.msra.mxu0 %v1657
        %1687 = vmatprep.subr.bf16.mxu0 %v1656
        %1688 = vmatpush1.bf16.msra.mxu0 %v1655
        %1689 = vmatprep.subr.bf16.mxu0 %v1654
        %1690 = vmatpush1.bf16.msra.mxu0 %v1653
        %1691 = vmatprep.subr.bf16.mxu0 0
        %1692 = vmatpush2.bf16.msra.mxu0 0
        %1693 = vmatprep.subr.bf16.mxu0 0
        %1694 = vmatpush2.bf16.msra.mxu0 0
        %1695 = vmatprep.subr.bf16.mxu0 0
        %1696 = vmatpush2.bf16.msra.mxu0 0
        %1697 = vmatprep.subr.bf16.mxu0 0
        %1698 = vmatpush2.bf16.msra.mxu0 0
        %1699 = vmatprep.subr.bf16.mxu0 0
        %1700 = vmatpush2.bf16.msra.mxu0 0
        %1701 = vmatprep.subr.bf16.mxu0 0
        %1702 = vmatpush2.bf16.msra.mxu0 0
        %1703 = vmatprep.subr.bf16.mxu0 0
        %1704 = vmatpush2.bf16.msra.mxu0 0
        %1705 = vmatprep.subr.bf16.mxu0 0
        %1706 = vmatpush2.bf16.msra.mxu0 0
        %1707 = vmatprep.mubr.bf16.mxu0 0
        %1708 = vmatmul.mubr.bf16.gmra.mxu0 %v1670
        %v1709 = vpop.f32.mrf.mxu0
        %v1710 = vadd.f32 %v1622, %v1709
        %v1711 = vpop.f32.mrf.mxu0
        %v1712 = vadd.f32 %v1626, %v1711
        %v1713 = vpop.f32.mrf.mxu0
        %v1714 = vadd.f32 %v1622, %v1713
        %v1715 = vpop.f32.mrf.mxu0
        %1716 = vmatprep.mubr.bf16.mxu0 0
        %1717 = vmatmul.mubr.bf16.gmra.mxu0 %v1673
        %v1718 = vpop.f32.mrf.mxu0
        %v1719 = vadd.f32 %v1622, %v1718
        %v1720 = vpop.f32.mrf.mxu0
        %v1721 = vpop.f32.mrf.mxu0
        %v1722 = vpop.f32.mrf.mxu0
        %1723 = vdwg.mxu0
        %v1724 = vrot.slane %v1710, 7
        %v1725 = vmul.f32 %v1724, %v388
        %v1726 = vrot.slane %v1710, 1
        %v1727 = vmul.f32 %v1726, %v391
        %v1728 = vlaneseq
        %v1729 = vshrl.u32 %v1728, 7
        %v1730 = vsub.s32 0, %v1729
        %v1731 = vrot.slane %v1719, %v1730
        %v1732 = vmul.f32 %v1725, %v1712
        %v1733 = vmul.f32 %v1710, %v1712
        %v1734 = vmul.f32 %v1727, %v1712
        %v1735 = vmul.f32 %v1714, %v1712
        %v1736 = vmul.f32 %v1731, %v1712
        %v1738 = vsel %vm460, %v1732, 0
        %v1741 = vsel %vm460, %v1733, 0
        %v1744 = vsel %vm460, %v1734, 0
        %v1747 = vsel %vm460, %v1735, 0
        %v1750 = vsel %vm460, %v1736, 0
        %1752 = vmatprep.subr.mxu0 0.0
        %1753 = vmatpush1.msra.mxu0 0.0
        %1754 = vmatprep.subr.mxu0 0.0
        %1755 = vmatpush1.msra.mxu0 0.0
        %1756 = vmatprep.subr.mxu0 0.0
        %1757 = vmatpush1.msra.mxu0 0.0
        %1758 = vmatprep.subr.mxu0 0.0
        %1759 = vmatpush1.msra.mxu0 0.0
        %1760 = vmatprep.subr.mxu0 0.0
        %1761 = vmatpush1.msra.mxu0 0.0
        %1762 = vmatprep.subr.mxu0 0.0
        %1763 = vmatpush1.msra.mxu0 0.0
        %1764 = vmatprep.subr.mxu0 0.0
        %1765 = vmatpush1.msra.mxu0 0.0
        %1766 = vmatprep.subr.mxu0 0.0
        %1767 = vmatpush1.msra.mxu0 0.0
        %1768 = vmatprep.subr.mxu0 0.0
        %1769 = vmatpush1.msra.mxu0 %v376
        %1770 = vmatprep.subr.mxu0 0.0
        %1771 = vmatpush1.msra.mxu0 %v375
        %1772 = vmatprep.subr.mxu0 0.0
        %1773 = vmatpush1.msra.mxu0 %v374
        %1774 = vmatprep.subr.mxu0 0.0
        %1775 = vmatpush1.msra.mxu0 %v373
        %1776 = vmatprep.subr.mxu0 0.0
        %1777 = vmatpush1.msra.mxu0 %v372
        %1778 = vmatprep.subr.mxu0 0.0
        %1779 = vmatpush1.msra.mxu0 %v371
        %1780 = vmatprep.subr.mxu0 0.0
        %1781 = vmatpush1.msra.mxu0 %v370
        %1782 = vmatprep.subr.mxu0 0.0
        %1783 = vmatpush1.msra.mxu0 %v369
        %1784 = vmatprep.subr.mxu0 0.0
        %1785 = vmatpush2.msra.mxu0 0.0
        %1786 = vmatprep.subr.mxu0 0.0
        %1787 = vmatpush2.msra.mxu0 0.0
        %1788 = vmatprep.subr.mxu0 0.0
        %1789 = vmatpush2.msra.mxu0 0.0
        %1790 = vmatprep.subr.mxu0 0.0
        %1791 = vmatpush2.msra.mxu0 0.0
        %1792 = vmatprep.subr.mxu0 0.0
        %1793 = vmatpush2.msra.mxu0 0.0
        %1794 = vmatprep.subr.mxu0 0.0
        %1795 = vmatpush2.msra.mxu0 0.0
        %1796 = vmatprep.subr.mxu0 0.0
        %1797 = vmatpush2.msra.mxu0 0.0
        %1798 = vmatprep.subr.mxu0 0.0
        %1799 = vmatpush2.msra.mxu0 0.0
        %1800 = vmatprep.subr.mxu0 0.0
        %1801 = vmatpush2.msra.mxu0 0.0
        %1802 = vmatprep.subr.mxu0 0.0
        %1803 = vmatpush2.msra.mxu0 0.0
        %1804 = vmatprep.subr.mxu0 0.0
        %1805 = vmatpush2.msra.mxu0 0.0
        %1806 = vmatprep.subr.mxu0 0.0
        %1807 = vmatpush2.msra.mxu0 0.0
        %1808 = vmatprep.subr.mxu0 0.0
        %1809 = vmatpush2.msra.mxu0 0.0
        %1810 = vmatprep.subr.mxu0 0.0
        %1811 = vmatpush2.msra.mxu0 0.0
        %1812 = vmatprep.subr.mxu0 0.0
        %1813 = vmatpush2.msra.mxu0 0.0
        %1814 = vmatprep.subr.mxu0 0.0
        %1815 = vmatpush2.msra.mxu0 0.0
        %1816 = vmatprep.mubr.f32.mxu0 0.0
        %1817 = vmatmul.mubr.f32.gmra.mxu0 %v1738
        %v1818 = vpop.f32.mrf.mxu0
        %v1819 = vadd.f32 0.0, %v1818
        %v1820 = vpop.f32.mrf.mxu0
        %1821 = vmatprep.mubr.f32.mxu0 0.0
        %1822 = vmatmul.mubr.f32.gmra.mxu0 %v1741
        %v1823 = vpop.f32.mrf.mxu0
        %v1824 = vadd.f32 0.0, %v1823
        %v1825 = vpop.f32.mrf.mxu0
        %1826 = vmatprep.mubr.f32.mxu0 0.0
        %1827 = vmatmul.mubr.f32.gmra.mxu0 %v1744
        %v1828 = vpop.f32.mrf.mxu0
        %v1829 = vadd.f32 0.0, %v1828
        %v1830 = vpop.f32.mrf.mxu0
        %1831 = vmatprep.mubr.f32.mxu0 0.0
        %1832 = vmatmul.mubr.f32.gmra.mxu0 %v1747
        %v1833 = vpop.f32.mrf.mxu0
        %v1834 = vadd.f32 0.0, %v1833
        %v1835 = vpop.f32.mrf.mxu0
        %1836 = vmatprep.mubr.f32.mxu0 0.0
        %1837 = vmatmul.mubr.f32.gmra.mxu0 %v1750
        %v1838 = vpop.f32.mrf.mxu0
        %v1839 = vadd.f32 0.0, %v1838
        %v1840 = vpop.f32.mrf.mxu0
        %1841 = vdwg.mxu0
        %v1842 = vsel %vm729, %v1819, -inf
        %v1843 = vsel %vm729, %v1824, -inf
        %v1844 = vsel %vm729, %v1829, -inf
        %v1845 = vsel %vm729, %v1834, -inf
        %v1846 = vsel %vm729, %v1839, -inf
        %v1847 = vmax.f32 %v1842, %v1846
        %v1848 = vmax.f32 %v1847, %v1843
        %v1849 = vmax.f32 %v1844, %v1845
        %v1850 = vmax.f32 %v1848, %v1849
        %v1851 = vsub.f32 %v1819, %v1850
        %v1852 = vsub.f32 %v1824, %v1850
        %v1853 = vsub.f32 %v1829, %v1850
        %v1854 = vsub.f32 %v1834, %v1850
        %v1855 = vsub.f32 %v1839, %v1850
        %v1856 = vmul.f32 %v1851, 1.442695
        %v1857 = vpow.pop %v1856
        %v1858 = vmul.f32 %v1852, 1.442695
        %v1859 = vpow.pop %v1858
        %v1860 = vmul.f32 %v1853, 1.442695
        %v1861 = vpow.pop %v1860
        %v1862 = vmul.f32 %v1854, 1.442695
        %v1863 = vpow.pop %v1862
        %v1864 = vmul.f32 %v1855, 1.442695
        %v1865 = vpow.pop %v1864
        %v1866 = vsel %vm729, %v1857, 0.0
        %v1867 = vsel %vm729, %v1859, 0.0
        %v1868 = vadd.f32 %v1866, %v1867
        %v1869 = vsel %vm729, %v1861, 0.0
        %v1870 = vadd.f32 %v1868, %v1869
        %v1871 = vsel %vm729, %v1863, 0.0
        %v1872 = vadd.f32 %v1870, %v1871
        %v1873 = vsel %vm729, %v1865, 0.0
        %v1874 = vadd.f32 %v1872, %v1873
        %v1875 = vrcp.pop %v1874
        %v1876 = vmul.f32 %v1857, %v1875
        %v1877 = vmul.f32 %v1859, %v1875
        %v1878 = vmul.f32 %v1861, %v1875
        %v1879 = vmul.f32 %v1863, %v1875
        %v1880 = vmul.f32 %v1865, %v1875
        %v1882 = vsel %vm729, %v1876, 0
        %v1885 = vsel %vm729, %v1877, 0
        %v1888 = vsel %vm729, %v1878, 0
        %v1891 = vsel %vm729, %v1879, 0
        %v1894 = vsel %vm729, %v1880, 0
        %1896 = vmatprep.subr.mxu0 0.0
        %1897 = vmatpush1.msra.mxu0 0.0
        %1898 = vmatprep.subr.mxu0 0.0
        %1899 = vmatpush1.msra.mxu0 0.0
        %1900 = vmatprep.subr.mxu0 0.0
        %1901 = vmatpush1.msra.mxu0 0.0
        %1902 = vmatprep.subr.mxu0 0.0
        %1903 = vmatpush1.msra.mxu0 0.0
        %1904 = vmatprep.subr.mxu0 0.0
        %1905 = vmatpush1.msra.mxu0 0.0
        %1906 = vmatprep.subr.mxu0 0.0
        %1907 = vmatpush1.msra.mxu0 0.0
        %1908 = vmatprep.subr.mxu0 0.0
        %1909 = vmatpush1.msra.mxu0 0.0
        %1910 = vmatprep.subr.mxu0 0.0
        %1911 = vmatpush1.msra.mxu0 0.0
        %1912 = vmatprep.subr.mxu0 0.0
        %1913 = vmatpush1.msra.mxu0 0.0
        %1914 = vmatprep.subr.mxu0 0.0
        %1915 = vmatpush1.msra.mxu0 0.0
        %1916 = vmatprep.subr.mxu0 0.0
        %1917 = vmatpush1.msra.mxu0 0.0
        %1918 = vmatprep.subr.mxu0 0.0
        %1919 = vmatpush1.msra.mxu0 0.0
        %1920 = vmatprep.subr.mxu0 0.0
        %1921 = vmatpush1.msra.mxu0 0.0
        %1922 = vmatprep.subr.mxu0 0.0
        %1923 = vmatpush1.msra.mxu0 0.0
        %1924 = vmatprep.subr.mxu0 0.0
        %1925 = vmatpush1.msra.mxu0 0.0
        %1926 = vmatprep.subr.mxu0 0.0
        %1927 = vmatpush1.msra.mxu0 %v788
        %1928 = vmatprep.subr.mxu0 0.0
        %1929 = vmatpush2.msra.mxu0 0.0
        %1930 = vmatprep.subr.mxu0 0.0
        %1931 = vmatpush2.msra.mxu0 0.0
        %1932 = vmatprep.subr.mxu0 0.0
        %1933 = vmatpush2.msra.mxu0 0.0
        %1934 = vmatprep.subr.mxu0 0.0
        %1935 = vmatpush2.msra.mxu0 0.0
        %1936 = vmatprep.subr.mxu0 0.0
        %1937 = vmatpush2.msra.mxu0 0.0
        %1938 = vmatprep.subr.mxu0 0.0
        %1939 = vmatpush2.msra.mxu0 0.0
        %1940 = vmatprep.subr.mxu0 0.0
        %1941 = vmatpush2.msra.mxu0 0.0
        %1942 = vmatprep.subr.mxu0 0.0
        %1943 = vmatpush2.msra.mxu0 0.0
        %1944 = vmatprep.subr.mxu0 0.0
        %1945 = vmatpush2.msra.mxu0 0.0
        %1946 = vmatprep.subr.mxu0 0.0
        %1947 = vmatpush2.msra.mxu0 0.0
        %1948 = vmatprep.subr.mxu0 0.0
        %1949 = vmatpush2.msra.mxu0 0.0
        %1950 = vmatprep.subr.mxu0 0.0
        %1951 = vmatpush2.msra.mxu0 0.0
        %1952 = vmatprep.subr.mxu0 0.0
        %1953 = vmatpush2.msra.mxu0 0.0
        %1954 = vmatprep.subr.mxu0 0.0
        %1955 = vmatpush2.msra.mxu0 0.0
        %1956 = vmatprep.subr.mxu0 0.0
        %1957 = vmatpush2.msra.mxu0 0.0
        %1958 = vmatprep.subr.mxu0 0.0
        %1959 = vmatpush2.msra.mxu0 0.0
        %1960 = vmatprep.mubr.f32.mxu0 0.0
        %1961 = vmatmul.mubr.f32.gmra.mxu0 %v1882
        %v1962 = vpop.f32.mrf.mxu0
        %v1963 = vadd.f32 0.0, %v1962
        %v1964 = vpop.f32.mrf.mxu0
        %1965 = vmatprep.mubr.f32.mxu0 0.0
        %1966 = vmatmul.mubr.f32.gmra.mxu0 %v1885
        %v1967 = vpop.f32.mrf.mxu0
        %v1968 = vadd.f32 0.0, %v1967
        %v1969 = vpop.f32.mrf.mxu0
        %1970 = vmatprep.mubr.f32.mxu0 0.0
        %1971 = vmatmul.mubr.f32.gmra.mxu0 %v1888
        %v1972 = vpop.f32.mrf.mxu0
        %v1973 = vadd.f32 0.0, %v1972
        %v1974 = vpop.f32.mrf.mxu0
        %1975 = vmatprep.mubr.f32.mxu0 0.0
        %1976 = vmatmul.mubr.f32.gmra.mxu0 %v1891
        %v1977 = vpop.f32.mrf.mxu0
        %v1978 = vadd.f32 0.0, %v1977
        %v1979 = vpop.f32.mrf.mxu0
        %1980 = vmatprep.mubr.f32.mxu0 0.0
        %1981 = vmatmul.mubr.f32.gmra.mxu0 %v1894
        %v1982 = vpop.f32.mrf.mxu0
        %v1983 = vadd.f32 0.0, %v1982
        %v1984 = vpop.f32.mrf.mxu0
        %1985 = vdwg.mxu0
        %1991 = vrot.lane.b32.xlu0 %v1725, 64
        %v1992 = vpop.permute.xlu0 %1991
        %1993 = vrot.lane.b32.xlu0 %v1710, 64
        %v1994 = vpop.permute.xlu0 %1993
        %1995 = vrot.lane.b32.xlu0 %v1727, 64
        %v1996 = vpop.permute.xlu0 %1995
        %1997 = vrot.lane.b32.xlu0 %v1714, 64
        %v1998 = vpop.permute.xlu0 %1997
        %1999 = vrot.lane.b32.xlu0 %v1731, 64
        %v2000 = vpop.permute.xlu0 %1999
        %v2006 = vmul.f32 %v1963, %v1992
        %v2007 = vmul.f32 %v1968, %v1994
        %v2008 = vmul.f32 %v1973, %v1996
        %v2009 = vmul.f32 %v1978, %v1998
        %v2010 = vmul.f32 %v1983, %v2000
        %v2011 = vsel %vm460, %v2006, 0.0
        %v2012 = vsel %vm460, %v2007, 0.0
        %v2013 = vadd.f32 %v2011, %v2012
        %v2014 = vsel %vm460, %v2008, 0.0
        %v2015 = vadd.f32 %v2013, %v2014
        %v2016 = vsel %vm460, %v2009, 0.0
        %v2017 = vadd.f32 %v2015, %v2016
        %v2018 = vsel %vm460, %v2010, 0.0
        %v2019 = vadd.f32 %v2017, %v2018
        %v2020 = vld [vmem:[%s1605 + $0x4] sm:$0xf]
        %v2021 = vld [vmem:[%s1605 + $0x14] sm:$0xf]
        %v2022 = vld [vmem:[%s1605 + $0x24] sm:$0xf]
        %v2023 = vld [vmem:[%s1605 + $0x34] sm:$0xf]
        %v2024 = vld [vmem:[%s1605 + $0x44] sm:$0xf]
        %v2025 = vld [vmem:[%s1605 + $0x54] sm:$0xf]
        %v2026 = vld [vmem:[%s1605 + $0x64] sm:$0xf]
        %v2027 = vld [vmem:[%s1605 + $0x74] sm:$0xf]
        %v2028 = vpack.c.bf16 %v2019, %v2019
        %v2029 = vld [vmem:[#allocation12 + $0x3] sm:$0x1]
        %v2030 = vlaneseq
        %v2031 = vshrl.u32 %v2030, 7
        %v2032 = vsub.s32 0, %v2031
        %v2033 = vrot.slane %v2029, %v2032
        %v2042 = vunpack.c.l.b16 %v2020
        %v2043 = vunpack.c.l.b16 %v2021
        %v2044 = vunpack.c.l.b16 %v2022
        %v2045 = vunpack.c.l.b16 %v2023
        %v2046 = vunpack.c.l.b16 %v2024
        %v2047 = vunpack.c.l.b16 %v2025
        %v2048 = vunpack.c.l.b16 %v2026
        %v2049 = vunpack.c.l.b16 %v2027
        %v2050 = vpack.c.b16 %v2043, %v2042
        %v2051 = vpack.c.b16 %v2045, %v2044
        %v2052 = vpack.c.b16 %v2047, %v2046
        %v2053 = vpack.c.b16 %v2049, %v2048
        %2054 = vrot.lane.b32.xlu0 %v2050, 64
        %v2055 = vpop.permute.xlu0 %2054
        %2056 = vrot.lane.b32.xlu0 %v2051, 64
        %v2057 = vpop.permute.xlu0 %2056
        %2058 = vrot.lane.b32.xlu0 %v2052, 64
        %v2059 = vpop.permute.xlu0 %2058
        %2060 = vrot.lane.b32.xlu0 %v2053, 64
        %v2061 = vpop.permute.xlu0 %2060
        %2067 = vrot.lane.b32.xlu0 %v2033, 64
        %v2068 = vpop.permute.xlu0 %2067
        %v2071 = vsel %vm460, %v2028, 0
        %2073 = vmatprep.subr.bf16.mxu0 0
        %2074 = vmatpush1.bf16.msra.mxu0 0
        %2075 = vmatprep.subr.bf16.mxu0 0
        %2076 = vmatpush1.bf16.msra.mxu0 0
        %2077 = vmatprep.subr.bf16.mxu0 0
        %2078 = vmatpush1.bf16.msra.mxu0 0
        %2079 = vmatprep.subr.bf16.mxu0 0
        %2080 = vmatpush1.bf16.msra.mxu0 0
        %2081 = vmatprep.subr.bf16.mxu0 0
        %2082 = vmatpush1.bf16.msra.mxu0 %v2061
        %2083 = vmatprep.subr.bf16.mxu0 0
        %2084 = vmatpush1.bf16.msra.mxu0 %v2059
        %2085 = vmatprep.subr.bf16.mxu0 0
        %2086 = vmatpush1.bf16.msra.mxu0 %v2057
        %2087 = vmatprep.subr.bf16.mxu0 0
        %2088 = vmatpush1.bf16.msra.mxu0 %v2055
        %2089 = vmatprep.subr.bf16.mxu0 0
        %2090 = vmatpush2.bf16.msra.mxu0 0
        %2091 = vmatprep.subr.bf16.mxu0 0
        %2092 = vmatpush2.bf16.msra.mxu0 0
        %2093 = vmatprep.subr.bf16.mxu0 0
        %2094 = vmatpush2.bf16.msra.mxu0 0
        %2095 = vmatprep.subr.bf16.mxu0 0
        %2096 = vmatpush2.bf16.msra.mxu0 0
        %2097 = vmatprep.subr.bf16.mxu0 0
        %2098 = vmatpush2.bf16.msra.mxu0 0
        %2099 = vmatprep.subr.bf16.mxu0 0
        %2100 = vmatpush2.bf16.msra.mxu0 0
        %2101 = vmatprep.subr.bf16.mxu0 0
        %2102 = vmatpush2.bf16.msra.mxu0 0
        %2103 = vmatprep.subr.bf16.mxu0 0
        %2104 = vmatpush2.bf16.msra.mxu0 0
        %2105 = vmatprep.mubr.bf16.mxu0 0
        %2106 = vmatmul.mubr.bf16.gmra.mxu0 %v2071
        %v2107 = vpop.f32.mrf.mxu0
        %v2108 = vadd.f32 %v2068, %v2107
        %v2109 = vpop.f32.mrf.mxu0
        %v2110 = vpop.f32.mrf.mxu0
        %v2111 = vpop.f32.mrf.mxu0
        %2112 = vdwg.mxu0
        %vm2113 = vcmp.gt.f32.partialorder %v2108, 0.0
        %v2114 = vmul.f32 %v2108, 0.01
        %v2115 = vsel %vm2113, %v2108, %v2114
        %v2116 = vmul.f32 %v2115, %v384
        %s2117 = scalar_lea.vmem [#allocation13], 32
        %v2118 = vld [vmem:[%s2117] sm:$0xf]
        %v2119 = vld [vmem:[%s2117 + $0x4] sm:$0xf]
        %v2120 = vld [vmem:[%s2117 + $0x8] sm:$0xf]
        %v2121 = vld [vmem:[%s2117 + $0xc] sm:$0xf]
        %v2122 = vld [vmem:[%s2117 + $0x10] sm:$0xf]
        %v2123 = vld [vmem:[%s2117 + $0x14] sm:$0xf]
        %v2124 = vld [vmem:[%s2117 + $0x18] sm:$0xf]
        %v2125 = vld [vmem:[%s2117 + $0x1c] sm:$0xf]
        %v2126 = vpack.c.bf16 %v2116, %v2116
        %v2127 = vld [vmem:[%s7 + $0x1] sm:$0x1]
        %v2128 = vlaneseq
        %v2129 = vshrl.u32 %v2128, 7
        %v2130 = vsub.s32 0, %v2129
        %v2131 = vrot.slane %v2127, %v2130
        %v2140 = vunpack.c.l.b16 %v2118
        %v2141 = vunpack.c.l.b16 %v2119
        %v2142 = vunpack.c.l.b16 %v2120
        %v2143 = vunpack.c.l.b16 %v2121
        %v2144 = vunpack.c.l.b16 %v2122
        %v2145 = vunpack.c.l.b16 %v2123
        %v2146 = vunpack.c.l.b16 %v2124
        %v2147 = vunpack.c.l.b16 %v2125
        %v2148 = vpack.c.b16 %v2141, %v2140
        %v2149 = vpack.c.b16 %v2143, %v2142
        %v2150 = vpack.c.b16 %v2145, %v2144
        %v2151 = vpack.c.b16 %v2147, %v2146
        %v2157 = vsel %vm460, %v2126, 0
        %2159 = vmatprep.subr.bf16.mxu0 0
        %2160 = vmatpush1.bf16.msra.mxu0 0
        %2161 = vmatprep.subr.bf16.mxu0 0
        %2162 = vmatpush1.bf16.msra.mxu0 0
        %2163 = vmatprep.subr.bf16.mxu0 0
        %2164 = vmatpush1.bf16.msra.mxu0 0
        %2165 = vmatprep.subr.bf16.mxu0 0
        %2166 = vmatpush1.bf16.msra.mxu0 0
        %2167 = vmatprep.subr.bf16.mxu0 0
        %2168 = vmatpush1.bf16.msra.mxu0 %v2151
        %2169 = vmatprep.subr.bf16.mxu0 0
        %2170 = vmatpush1.bf16.msra.mxu0 %v2150
        %2171 = vmatprep.subr.bf16.mxu0 0
        %2172 = vmatpush1.bf16.msra.mxu0 %v2149
        %2173 = vmatprep.subr.bf16.mxu0 0
        %2174 = vmatpush1.bf16.msra.mxu0 %v2148
        %2175 = vmatprep.subr.bf16.mxu0 0
        %2176 = vmatpush2.bf16.msra.mxu0 0
        %2177 = vmatprep.subr.bf16.mxu0 0
        %2178 = vmatpush2.bf16.msra.mxu0 0
        %2179 = vmatprep.subr.bf16.mxu0 0
        %2180 = vmatpush2.bf16.msra.mxu0 0
        %2181 = vmatprep.subr.bf16.mxu0 0
        %2182 = vmatpush2.bf16.msra.mxu0 0
        %2183 = vmatprep.subr.bf16.mxu0 0
        %2184 = vmatpush2.bf16.msra.mxu0 0
        %2185 = vmatprep.subr.bf16.mxu0 0
        %2186 = vmatpush2.bf16.msra.mxu0 0
        %2187 = vmatprep.subr.bf16.mxu0 0
        %2188 = vmatpush2.bf16.msra.mxu0 0
        %2189 = vmatprep.subr.bf16.mxu0 0
        %2190 = vmatpush2.bf16.msra.mxu0 0
        %2191 = vmatprep.mubr.bf16.mxu0 0
        %2192 = vmatmul.mubr.bf16.gmra.mxu0 %v2157
        %v2193 = vpop.f32.mrf.mxu0
        %v2194 = vadd.f32 %v2131, %v2193
        %v2195 = vpop.f32.mrf.mxu0
        %v2196 = vpop.f32.mrf.mxu0
        %v2197 = vpop.f32.mrf.mxu0
        %2198 = vdwg.mxu0
        %vm2199 = vcmp.gt.f32.partialorder %v2194, 0.0
        %v2200 = vmul.f32 %v2194, 0.01
        %v2201 = vsel %vm2199, %v2194, %v2200
        %s2202 = scalar_lea.vmem [#allocation13], 64
        %v2203 = vld [vmem:[%s2202] sm:$0xf]
        %v2204 = vld [vmem:[%s2202 + $0x4] sm:$0xf]
        %v2205 = vld [vmem:[%s2202 + $0x8] sm:$0xf]
        %v2206 = vld [vmem:[%s2202 + $0xc] sm:$0xf]
        %v2207 = vld [vmem:[%s2202 + $0x10] sm:$0xf]
        %v2208 = vld [vmem:[%s2202 + $0x14] sm:$0xf]
        %v2209 = vld [vmem:[%s2202 + $0x18] sm:$0xf]
        %v2210 = vld [vmem:[%s2202 + $0x1c] sm:$0xf]
        %v2211 = vpack.c.bf16 %v2201, %v2201
        %v2212 = vld [vmem:[%s7 + $0x2] sm:$0x1]
        %v2213 = vlaneseq
        %v2214 = vshrl.u32 %v2213, 7
        %v2215 = vsub.s32 0, %v2214
        %v2216 = vrot.slane %v2212, %v2215
        %v2225 = vunpack.c.l.b16 %v2203
        %v2226 = vunpack.c.l.b16 %v2204
        %v2227 = vunpack.c.l.b16 %v2205
        %v2228 = vunpack.c.l.b16 %v2206
        %v2229 = vunpack.c.l.b16 %v2207
        %v2230 = vunpack.c.l.b16 %v2208
        %v2231 = vunpack.c.l.b16 %v2209
        %v2232 = vunpack.c.l.b16 %v2210
        %v2233 = vpack.c.b16 %v2226, %v2225
        %v2234 = vpack.c.b16 %v2228, %v2227
        %v2235 = vpack.c.b16 %v2230, %v2229
        %v2236 = vpack.c.b16 %v2232, %v2231
        %v2242 = vsel %vm460, %v2211, 0
        %2244 = vmatprep.subr.bf16.mxu0 0
        %2245 = vmatpush1.bf16.msra.mxu0 0
        %2246 = vmatprep.subr.bf16.mxu0 0
        %2247 = vmatpush1.bf16.msra.mxu0 0
        %2248 = vmatprep.subr.bf16.mxu0 0
        %2249 = vmatpush1.bf16.msra.mxu0 0
        %2250 = vmatprep.subr.bf16.mxu0 0
        %2251 = vmatpush1.bf16.msra.mxu0 0
        %2252 = vmatprep.subr.bf16.mxu0 0
        %2253 = vmatpush1.bf16.msra.mxu0 %v2236
        %2254 = vmatprep.subr.bf16.mxu0 0
        %2255 = vmatpush1.bf16.msra.mxu0 %v2235
        %2256 = vmatprep.subr.bf16.mxu0 0
        %2257 = vmatpush1.bf16.msra.mxu0 %v2234
        %2258 = vmatprep.subr.bf16.mxu0 0
        %2259 = vmatpush1.bf16.msra.mxu0 %v2233
        %2260 = vmatprep.subr.bf16.mxu0 0
        %2261 = vmatpush2.bf16.msra.mxu0 0
        %2262 = vmatprep.subr.bf16.mxu0 0
        %2263 = vmatpush2.bf16.msra.mxu0 0
        %2264 = vmatprep.subr.bf16.mxu0 0
        %2265 = vmatpush2.bf16.msra.mxu0 0
        %2266 = vmatprep.subr.bf16.mxu0 0
        %2267 = vmatpush2.bf16.msra.mxu0 0
        %2268 = vmatprep.subr.bf16.mxu0 0
        %2269 = vmatpush2.bf16.msra.mxu0 0
        %2270 = vmatprep.subr.bf16.mxu0 0
        %2271 = vmatpush2.bf16.msra.mxu0 0
        %2272 = vmatprep.subr.bf16.mxu0 0
        %2273 = vmatpush2.bf16.msra.mxu0 0
        %2274 = vmatprep.subr.bf16.mxu0 0
        %2275 = vmatpush2.bf16.msra.mxu0 0
        %2276 = vmatprep.mubr.bf16.mxu0 0
        %2277 = vmatmul.mubr.bf16.gmra.mxu0 %v2242
        %v2278 = vpop.f32.mrf.mxu0
        %v2279 = vadd.f32 %v2216, %v2278
        %v2280 = vpop.f32.mrf.mxu0
        %v2281 = vpop.f32.mrf.mxu0
        %v2282 = vpop.f32.mrf.mxu0
        %2283 = vdwg.mxu0
        %2284 = vst [vmem:[%s367] sm:$0xff] %v2279
        %s2285 = sand.u32 %s192, 1
        %s2286 = scalar_lea.sflag [#allocation6], %s2285
        %s2287 = sand.u32 %s192, 1
        %s2288 = smul.addr %s2287, 8
        %s2289 = scalar_lea.vmem [#allocation15], %s2288
        // Predicated region
        $region73: #{tpu_custom_call.1} parent=47 // pred_check
          %p2290 = pneg %p202
        $region74: #{tpu_custom_call.1} parent=47 // pred_check_branch
          %2292 = sbr.rel (%p2290) target = $region76
        $region75: #{tpu_custom_call.1} parent=47 // pred_region
          %s2294 = ssub.s32 128, 128
          %2295 = vsyncadd %s2286, %s2294
          %s2296 = smul.addr %s32, 128
          %s2297 = scalar_lea.hbm %s8, %s2296
          %s2299 = sshll.u32 %s2289, 4
          %s2300 = int_to_ptr.vmem [resolvable:$true] %s2299
          %2302 = dma.vmem_to_hbm [thread:$0]  %s2300, 128, %s2297, %s2286
        $region76: #{tpu_custom_call.1} parent=47 // pred_fallthru
          _
      $region48: #{tpu_custom_call.1} parent=5 // pred_fallthru
        _
      %p2303 = scmp.le.s32.totalorder 2, %s27
      // Predicated region
      $region77: #{tpu_custom_call.1} parent=5 // pred_check
        %p2304 = pneg %p2303
      $region78: #{tpu_custom_call.1} parent=5 // pred_check_branch
        %2306 = sbr.rel (%p2304) target = $region80
      $region79: #{tpu_custom_call.1} parent=5 // pred_region
        %s2307 = ssub.s32 %s27, 2
        // Predicated region
        $region81: #{tpu_custom_call.1} parent=79 // pred_check
          %p2308 = pneg %p208
        $region82: #{tpu_custom_call.1} parent=79 // pred_check_branch
          %2310 = sbr.rel (%p2308) target = $region84
        $region83: #{tpu_custom_call.1} parent=79 // pred_region
          %s2311 = sand.u32 %s193, 1
          %s2312 = scalar_lea.sflag [#allocation6], %s2311
          %s2313 = sand.u32 %s193, 1
          %s2314 = smul.addr %s2313, 8
          %s2315 = scalar_lea.vmem [#allocation15], %s2314
          %2316 = dma.done %s2312, 128
        $region84: #{tpu_custom_call.1} parent=79 // pred_fallthru
          _
      $region80: #{tpu_custom_call.1} parent=5 // pred_fallthru
        _
    $region6: #{tpu_custom_call.1} parent=1 // loop_footer
      %s31 = sadd.s32 1, %s27
    $region7: #{tpu_custom_call.1} parent=1 // loop_footer_branch
      %26 = sbr.rel target = $region3
    $region8: #{tpu_custom_call.1} parent=1 // loop_exit
      _
    %2317 = vsyncpa [#allocation5], 1
    %s2318 = scalar_lea.sflag [#allocation5], 1
    %2319 = vsyncpa %s2318, 1
    %2320 = vsyncpa [#allocation8], 1
    %2321 = vsyncpa [#allocation11], 1
    %2322 = vsyncpa [#allocation14], 1
    %2323 = vsyncpa [#allocation6], 1
    %s2324 = scalar_lea.sflag [#allocation6], 1
    %2325 = vsyncpa %s2324, 1

</llo_original>
